<compile_context>
chip_gen: v6e
topology: v6e:2x2x1
jax: 0.10.0
libtpu: 0.0.40
codegen_flags: <defaults>
</compile_context>

<pallas_src>
import functools
import math

import jax
import jax.numpy as jnp
import numpy as np
from jax import lax
from jax.experimental import pallas as pl
from jax.experimental.pallas import tpu as pltpu


# ---------------------------------------------------------------------------
# Fused Bpa kernel (one grid step per batch element)
# ---------------------------------------------------------------------------
def _bpa_kernel(p1_ref, b3_ref, xp_ref, lsel_ref, rsel_ref, k2d_ref,
                wr_ref, ws_ref, b_ref, out_ref):
    # p1_ref  : (1, 9, HW)    f32  RangeStep logits, lane-dense (softmax over HW per tap).
    # b3_ref  : (1, C, HW)    f32  3x3 zero-padded box-sum of x (== tap-sum of unfolded_right
    #                              in the module's raw NCHW layout; scrambles cancel).
    # xp_ref  : (1, C, Hp*Wp) bf16 reflect-padded input, per-channel flattened onto lanes.
    # lsel_ref: (C, HW)       f32  L[ch,P]  = [P // q == ch]          (q = HW / C)
    # rsel_ref: (HW, HW)      f32  R[P,pos] = [P % q == pos // C]
    # k2d_ref : (Hp*Wp, HW)   bf16 kron(T,T) of the 1-D Gaussian Toeplitz band
    #                              (depthwise 17x17 conv as one MXU matmul).
    # wr_ref/ws_ref : (C, C)  f32  halves of the 1x1 combine-conv weight.
    # b_ref   : (C, 1)        f32  combine-conv bias.
    # out_ref : (1, C, HW)    f32  combined output (lane-dense, 256-wide stores).

    # ---- RangeStep: lane-dense softmax over H*W (one row per 3x3 tap) -------------------
    p1 = p1_ref[0]                                          # (9, HW)
    m = jnp.max(p1, axis=-1, keepdims=True)                 # (9, 1)
    ex = jnp.exp(p1 - m)
    z = jnp.sum(ex, axis=-1, keepdims=True)                 # (9, 1)
    sm = ex * pl.reciprocal(z, approx=True)                 # EUP reciprocal, VPU multiply
    ssum = jnp.sum(sm, axis=0, keepdims=True)               # (1, HW): sum over the 9 taps

    # Scatter Ssum into the module's scrambled NCHW layout:
    #   Sscr[ch, pos] = Ssum[ch*q + pos//c]  ==  (L * Ssum) @ R   (one small MXU matmul).
    sscr = jnp.dot(lsel_ref[...] * ssum, rsel_ref[...],
                   preferred_element_type=jnp.float32)      # (C, HW)
    ranged = sscr + b3_ref[0]                               # (C, HW)

    # ---- SpatialStep: depthwise 17x17 Gaussian conv == one bf16 MXU matmul --------------
    spat = jnp.dot(xp_ref[0], k2d_ref[...],
                   preferred_element_type=jnp.float32)      # (C, HW)

    # ---- Combine 1x1 conv (concat folded into two (C,C) matmuls + bias) -----------------
    out = (jnp.dot(wr_ref[...], ranged, preferred_element_type=jnp.float32)
           + jnp.dot(ws_ref[...], spat, preferred_element_type=jnp.float32)
           + b_ref[...])
    out_ref[0] = out


# ---------------------------------------------------------------------------
# Hoisted, shape-only constants (numpy, cached once per shape)
# ---------------------------------------------------------------------------
def _np_gaussian_1d(w):
    """1-D factor of SpatialStep's Gaussian: outer(g, g) == module's normalized kernel."""
    ks = w + 1
    mean = (w - 1) / 2.0
    var = float((3 * w) ** 2)
    coords = np.arange(ks, dtype=np.float64)
    e = np.exp(-((coords - mean) ** 2) / (2.0 * var))
    return (e / e.sum()).astype(np.float32)


def _np_toeplitz_band(g, out_size, pad):
    """T[m, i] = g[m - i] for 0 <= m - i < ks (valid cross-correlation as a matmul)."""
    ks = g.shape[0]
    rows = np.arange(out_size + 2 * pad)[:, None]
    cols = np.arange(out_size)[None, :]
    d = rows - cols
    return np.where((d >= 0) & (d < ks), g[np.clip(d, 0, ks - 1)], 0.0).astype(np.float32)


@functools.lru_cache(maxsize=None)
def _bpa_constants(c, h, w):
    hw = h * w
    q = hw // c
    p = w // 2

    # Scatter constants: Sscr[ch, pos] = Ssum[ch*q + pos//c] = ((L * Ssum) @ R)[ch, pos]
    pidx = np.arange(hw)
    lsel = (pidx[None, :] // q == np.arange(c)[:, None]).astype(np.float32)     # (c, hw)
    rsel = ((pidx[:, None] % q) == (pidx[None, :] // c)).astype(np.float32)     # (hw, hw)

    # SpatialStep: separable Gaussian -> Toeplitz (x) Toeplitz (fused kron; at spatial dims
    # beyond ~32-40 / v7x switch to two banded matmuls to keep the constant O(hw*ks)).
    g = _np_gaussian_1d(w)
    tb = _np_toeplitz_band(g, h, p)                      # (hp, h)
    k2d = np.kron(tb, tb).astype(np.float32)             # (hp*wp, hw)

    # RangeStep lsum boundary tables: group g' of channel ch sums stream[t], t in
    # [g'*c, (g'+1)*c) of the per-channel [pixel][tap] stream.  Prefix at boundary
    # T=b*c is cumBox[T//9] + (partial tap sum of the first T%9 taps at pixel T//9).
    nb = 9 * q + 1
    tbd = np.arange(nb) * c
    pixb = tbd // 9                                      # in [0, hw]
    kb = tbd % 9
    pixc = np.minimum(pixb, hw - 1)                      # clip only hits when kb == 0
    ib, jb = pixc // w, pixc % w
    kk = np.arange(9)
    rows = ib[None, :] + (kk // 3)[:, None]              # (9, nb) indices into 1-zero-padded x
    cols = jb[None, :] + (kk % 3)[:, None]
    tmask = (kk[:, None] < kb[None, :]).astype(np.float32)

    return dict(
        lsel=jnp.asarray(lsel),
        rsel=jnp.asarray(rsel),
        k2d=jnp.asarray(k2d, dtype=jnp.bfloat16),
        pixb=pixb, rows=rows, cols=cols,
        tmask=jnp.asarray(tmask),
    )


# ---------------------------------------------------------------------------
# Forward wrapper
# ---------------------------------------------------------------------------
def bpa_forward(x, wmat, bias):
    n, c, h, w = x.shape
    assert h == w and w % 2 == 0, "Bpa requires square spatial dims with even w"
    p = w // 2
    assert p <= h - 1, "reflect padding requires w//2 <= h-1"
    hw = h * w
    assert hw % c == 0, "H*W must be divisible by C (holds for MEDFE shapes)"
    hp, wp = h + 2 * p, w + 2 * p
    f32 = jnp.float32
    x = x.astype(f32)

    consts = _bpa_constants(c, h, w)

    # ---- RangeStep wrapper side: NO 9x unfold ---------------------------------------------
    # 3x3 zero-padded box sum (separable, 4 shifted adds): exact "tap-sum of unfolded_right".
    xz = jnp.pad(x, ((0, 0), (0, 0), (1, 1), (1, 1)))
    s1 = xz[:, :, 0:h, :] + xz[:, :, 1:h + 1, :] + xz[:, :, 2:h + 2, :]          # (n,c,h,w+2)
    box = s1[:, :, :, 0:w] + s1[:, :, :, 1:w + 1] + s1[:, :, :, 2:w + 2]         # (n,c,h,w)
    b3 = box.reshape(n, c, hw)

    # Scrambled "sum over last c of unfolded_left" via prefix sums + static boundary gather.
    cum = jnp.cumsum(b3, axis=-1)
    cum_ex = jnp.concatenate([jnp.zeros((n, c, 1), f32), cum], axis=-1)          # (n,c,hw+1)
    cs_box = cum_ex[:, :, consts["pixb"]]                                        # (n,c,nb)
    taps_b = xz[:, :, consts["rows"], consts["cols"]]                            # (n,c,9,nb)
    pt_b = jnp.sum(taps_b * consts["tmask"][None, None], axis=2)                 # (n,c,nb)
    cs_b = cs_box + pt_b
    lsum = (cs_b[..., 1:] - cs_b[..., :-1]).reshape(n, 9 * hw)                   # group sums
    msum = jnp.sum(x, axis=1).reshape(n, hw)                                     # channel sum
    p1 = lsum.reshape(n, hw, 9).transpose(0, 2, 1) + msum[:, None, :]            # (n, 9, hw)

    # ---- SpatialStep input (bf16 operand for the MXU matmul) -------------------------------
    xp = jnp.pad(x, ((0, 0), (0, 0), (p, p), (p, p)), mode="reflect")
    xp = xp.reshape(n, c, hp * wp).astype(jnp.bfloat16)

    # ---- combine conv parameters ------------------------------------------------------------
    wr = wmat[:, :c].astype(f32)
    ws = wmat[:, c:].astype(f32)
    b2 = bias.reshape(c, 1).astype(f32)

    flops = n * (2 * c * hp * wp * hw + 2 * c * hw * hw + 4 * c * c * hw)
    bytes_accessed = (n * 9 * hw * 4 + n * c * hw * 4 + n * c * hp * wp * 2
                      + c * hw * 4 + hw * hw * 4 + hp * wp * hw * 2
                      + 2 * c * c * 4 + c * 4 + n * c * hw * 4)

    out = pl.pallas_call(
        _bpa_kernel,
        out_shape=jax.ShapeDtypeStruct((n, c, hw), f32),
        grid=(n,),
        in_specs=[
            pl.BlockSpec((1, 9, hw), lambda i: (i, 0, 0)),
            pl.BlockSpec((1, c, hw), lambda i: (i, 0, 0)),
            pl.BlockSpec((1, c, hp * wp), lambda i: (i, 0, 0)),
            # constants: index_map is constant, so they are fetched once and stay resident.
            # (At real MEDFE shapes, mark these pipeline_mode=pl.Buffered(1) to drop the
            #  unused second pipeline buffer and fit v7x's 64 MiB VMEM.)
            pl.BlockSpec((c, hw), lambda i: (0, 0)),
            pl.BlockSpec((hw, hw), lambda i: (0, 0)),
            pl.BlockSpec((hp * wp, hw), lambda i: (0, 0)),
            pl.BlockSpec((c, c), lambda i: (0, 0)),
            pl.BlockSpec((c, c), lambda i: (0, 0)),
            pl.BlockSpec((c, 1), lambda i: (0, 0)),
        ],
        out_specs=pl.BlockSpec((1, c, hw), lambda i: (i, 0, 0)),
        compiler_params=pltpu.CompilerParams(
            dimension_semantics=("parallel",)),
        cost_estimate=pl.CostEstimate(flops=int(flops),
                                      transcendentals=int(n * 9 * hw),
                                      bytes_accessed=int(bytes_accessed)),
    )(p1, b3, xp, consts["lsel"], consts["rsel"], consts["k2d"], wr, ws, b2)

    return out.reshape(n, c, h, w)


# ---------------------------------------------------------------------------
# Pure-JAX reference (direct port of the PyTorch forward) for verification
# ---------------------------------------------------------------------------
def gaussian_kernel(w):
    """2-D kernel exactly as built in SpatialStep.__init__ (reference only)."""
    ks = w + 1
    mean = (w - 1) / 2.0
    var = float((3 * w) ** 2)
    coords = jnp.arange(ks, dtype=jnp.float32)
    d2 = (coords - mean) ** 2
    ker = (1.0 / (2.0 * math.pi * var)) * jnp.exp(-(d2[:, None] + d2[None, :]) / (2.0 * var))
    return ker / jnp.sum(ker)


def bpa_reference(x, ker, wmat, bias):
    n, c, h, w = x.shape
    # RangeStep (mirrors the module's raw-memory-order reshapes exactly)
    xpad = jnp.pad(x, ((0, 0), (0, 0), (1, 1), (1, 1)))
    neigh = jnp.stack(
        [jnp.stack([xpad[:, :, a:a + h, b:b + w] for b in range(3)], axis=-1)
         for a in range(3)], axis=-2)
    flat = neigh.reshape(n, -1)
    left = flat.reshape(n, h * w, 3, 3, c)
    right = flat.reshape(n, h * w, c, 3, 3)
    mid = jnp.transpose(x, (0, 2, 3, 1)).reshape(n, h * w, 1, 1, c)
    p1_sum = jnp.sum(left + mid, axis=4)
    sm = jax.nn.softmax(p1_sum, axis=1)
    final = jnp.sum(sm.reshape(n, h * w, 1, 3, 3) + right, axis=(3, 4))
    ranged = final.reshape(n, c, h, w)
    # SpatialStep (depthwise Gaussian conv with reflect padding)
    p = w // 2
    xpad2 = jnp.pad(x, ((0, 0), (0, 0), (p, p), (p, p)), mode="reflect")
    rhs = jnp.broadcast_to(ker, (c, 1, ker.shape[0], ker.shape[1]))
    spatialed = lax.conv_general_dilated(
        xpad2, rhs, window_strides=(1, 1), padding="VALID",
        dimension_numbers=("NCHW", "OIHW", "NCHW"), feature_group_count=c)
    # combine 1x1 conv
    comb = jnp.concatenate([ranged, spatialed], axis=1)
    return jnp.einsum("oc,nchw->nohw", wmat, comb) + bias[None, :, None, None]


if __name__ == "__main__":
    n, c, h, w = 2, 4, 16, 16          # module constraint: square, even spatial dims
    key = jax.random.PRNGKey(0)
    kx, kw_, kb_ = jax.random.split(key, 3)
    x = jax.random.normal(kx, (n, c, h, w), dtype=jnp.float32)

    # combine_conv parameters (deterministic synthetic init, torch-style bound)
    bound = 1.0 / math.sqrt(2 * c)
    wmat = jax.random.uniform(kw_, (c, 2 * c), minval=-bound, maxval=bound, dtype=jnp.float32)
    bias = jax.random.uniform(kb_, (c,), minval=-bound, maxval=bound, dtype=jnp.float32)

    out = jax.jit(bpa_forward)(x, wmat, bias)
    out = jax.block_until_ready(out)

    ref = bpa_reference(x, gaussian_kernel(w), wmat, bias)
    assert out.shape == (n, c, h, w)
    err = float(jnp.max(jnp.abs(out - ref)))
    assert jnp.allclose(out, ref, atol=1e-3, rtol=1e-3), err
    print("KERNEL_OK")
</pallas_src>

<mosaic_0001>
module attributes {stable_mosaic.version = 11 : i64} {
  func.func @_bpa_kernel(%arg0: i32, %arg1: memref<1x9x256xf32, #tpu.memory_space<vmem>>, %arg2: memref<1x4x256xf32, #tpu.memory_space<vmem>>, %arg3: memref<1x4x1024xbf16, #tpu.memory_space<vmem>>, %arg4: memref<4x256xf32, #tpu.memory_space<vmem>>, %arg5: memref<256x256xf32, #tpu.memory_space<vmem>>, %arg6: memref<1024x256xbf16, #tpu.memory_space<vmem>>, %arg7: memref<4x4xf32, #tpu.memory_space<vmem>>, %arg8: memref<4x4xf32, #tpu.memory_space<vmem>>, %arg9: memref<4x1xf32, #tpu.memory_space<vmem>>, %arg10: memref<1x4x256xf32, #tpu.memory_space<vmem>>) attributes {dimension_semantics = [#tpu.dimension_semantics<parallel>], iteration_bounds = array<i64: 2>, scalar_prefetch = 0 : i64, scratch_operands = 0 : i64, tpu.core_type = #tpu.core_type<tc>, window_params = [{transform_indices = @transform_0, window_bounds = array<i64: 1, 9, 256>}, {transform_indices = @transform_1, window_bounds = array<i64: 1, 4, 256>}, {transform_indices = @transform_2, window_bounds = array<i64: 1, 4, 1024>}, {pipeline_mode = #tpu.pipeline_mode<synchronous>, transform_indices = @transform_3, window_bounds = array<i64: 4, 256>}, {pipeline_mode = #tpu.pipeline_mode<synchronous>, transform_indices = @transform_4, window_bounds = array<i64: 256, 256>}, {pipeline_mode = #tpu.pipeline_mode<synchronous>, transform_indices = @transform_5, window_bounds = array<i64: 1024, 256>}, {pipeline_mode = #tpu.pipeline_mode<synchronous>, transform_indices = @transform_6, window_bounds = array<i64: 4, 4>}, {pipeline_mode = #tpu.pipeline_mode<synchronous>, transform_indices = @transform_7, window_bounds = array<i64: 4, 4>}, {pipeline_mode = #tpu.pipeline_mode<synchronous>, transform_indices = @transform_8, window_bounds = array<i64: 4, 1>}, {transform_indices = @transform_9, window_bounds = array<i64: 1, 4, 256>}]} {
    %c0 = arith.constant 0 : index
    %c0_0 = arith.constant 0 : index
    %c0_1 = arith.constant 0 : index
    %0 = vector.load %arg1[%c0, %c0_0, %c0_1] : memref<1x9x256xf32, #tpu.memory_space<vmem>>, vector<1x9x256xf32>
    %1 = vector.shape_cast %0 : vector<1x9x256xf32> to vector<9x256xf32>
    %cst = arith.constant dense<0xFF800000> : vector<9xf32>
    %2 = vector.multi_reduction <maximumf>, %1, %cst [1] : vector<9x256xf32> to vector<9xf32>
    %3 = vector.shape_cast %2 : vector<9xf32> to vector<9x1xf32>
    %4 = vector.broadcast %3 : vector<9x1xf32> to vector<9x256xf32>
    %5 = arith.subf %1, %4 : vector<9x256xf32>
    %6 = math.exp %5 : vector<9x256xf32>
    %cst_2 = arith.constant dense<0.000000e+00> : vector<9xf32>
    %7 = vector.multi_reduction <add>, %6, %cst_2 [1] : vector<9x256xf32> to vector<9xf32>
    %8 = vector.shape_cast %7 : vector<9xf32> to vector<9x1xf32>
    %9 = tpu.reciprocal %8 {approx = true} : vector<9x1xf32> -> vector<9x1xf32>
    %10 = vector.broadcast %9 : vector<9x1xf32> to vector<9x256xf32>
    %11 = arith.mulf %6, %10 : vector<9x256xf32>
    %cst_3 = arith.constant dense<0.000000e+00> : vector<256xf32>
    %12 = vector.multi_reduction <add>, %11, %cst_3 [0] : vector<9x256xf32> to vector<256xf32>
    %13 = vector.shape_cast %12 : vector<256xf32> to vector<1x256xf32>
    %c0_4 = arith.constant 0 : index
    %c0_5 = arith.constant 0 : index
    %14 = vector.load %arg4[%c0_4, %c0_5] : memref<4x256xf32, #tpu.memory_space<vmem>>, vector<4x256xf32>
    %15 = vector.broadcast %13 : vector<1x256xf32> to vector<4x256xf32>
    %16 = arith.mulf %14, %15 : vector<4x256xf32>
    %c0_6 = arith.constant 0 : index
    %c0_7 = arith.constant 0 : index
    %17 = vector.load %arg5[%c0_6, %c0_7] : memref<256x256xf32, #tpu.memory_space<vmem>>, vector<256x256xf32>
    %cst_8 = arith.constant dense<0.000000e+00> : vector<4x256xf32>
    %18 = tpu.matmul %16, %17, %cst_8 {dimension_numbers = #tpu.dot_dimension_numbers<[1], [0], [0], [1], [0, 0, 1, 1], [], []>} : vector<4x256xf32>, vector<256x256xf32>, vector<4x256xf32> -> vector<4x256xf32>
    %c0_9 = arith.constant 0 : index
    %c0_10 = arith.constant 0 : index
    %c0_11 = arith.constant 0 : index
    %19 = vector.load %arg2[%c0_9, %c0_10, %c0_11] : memref<1x4x256xf32, #tpu.memory_space<vmem>>, vector<1x4x256xf32>
    %20 = vector.shape_cast %19 : vector<1x4x256xf32> to vector<4x256xf32>
    %21 = arith.addf %18, %20 : vector<4x256xf32>
    %c0_12 = arith.constant 0 : index
    %c0_13 = arith.constant 0 : index
    %c0_14 = arith.constant 0 : index
    %22 = vector.load %arg3[%c0_12, %c0_13, %c0_14] : memref<1x4x1024xbf16, #tpu.memory_space<vmem>>, vector<1x4x1024xbf16>
    %23 = vector.shape_cast %22 : vector<1x4x1024xbf16> to vector<4x1024xbf16>
    %c0_15 = arith.constant 0 : index
    %c0_16 = arith.constant 0 : index
    %24 = vector.load %arg6[%c0_15, %c0_16] : memref<1024x256xbf16, #tpu.memory_space<vmem>>, vector<1024x256xbf16>
    %cst_17 = arith.constant dense<0.000000e+00> : vector<4x256xf32>
    %25 = tpu.matmul %23, %24, %cst_17 {dimension_numbers = #tpu.dot_dimension_numbers<[1], [0], [0], [1], [0, 0, 1, 1], [], []>} : vector<4x1024xbf16>, vector<1024x256xbf16>, vector<4x256xf32> -> vector<4x256xf32>
    %c0_18 = arith.constant 0 : index
    %c0_19 = arith.constant 0 : index
    %26 = vector.load %arg7[%c0_18, %c0_19] : memref<4x4xf32, #tpu.memory_space<vmem>>, vector<4x4xf32>
    %cst_20 = arith.constant dense<0.000000e+00> : vector<4x256xf32>
    %27 = tpu.matmul %26, %21, %cst_20 {dimension_numbers = #tpu.dot_dimension_numbers<[1], [0], [0], [1], [0, 0, 1, 1], [], []>} : vector<4x4xf32>, vector<4x256xf32>, vector<4x256xf32> -> vector<4x256xf32>
    %c0_21 = arith.constant 0 : index
    %c0_22 = arith.constant 0 : index
    %28 = vector.load %arg8[%c0_21, %c0_22] : memref<4x4xf32, #tpu.memory_space<vmem>>, vector<4x4xf32>
    %cst_23 = arith.constant dense<0.000000e+00> : vector<4x256xf32>
    %29 = tpu.matmul %28, %25, %cst_23 {dimension_numbers = #tpu.dot_dimension_numbers<[1], [0], [0], [1], [0, 0, 1, 1], [], []>} : vector<4x4xf32>, vector<4x256xf32>, vector<4x256xf32> -> vector<4x256xf32>
    %30 = arith.addf %27, %29 : vector<4x256xf32>
    %c0_24 = arith.constant 0 : index
    %c0_25 = arith.constant 0 : index
    %31 = vector.load %arg9[%c0_24, %c0_25] : memref<4x1xf32, #tpu.memory_space<vmem>>, vector<4x1xf32>
    %32 = vector.broadcast %31 : vector<4x1xf32> to vector<4x256xf32>
    %33 = arith.addf %30, %32 : vector<4x256xf32>
    %c0_26 = arith.constant 0 : index
    %c0_27 = arith.constant 0 : index
    %c0_28 = arith.constant 0 : index
    %34 = vector.load %arg10[%c0_26, %c0_27, %c0_28] : memref<1x4x256xf32, #tpu.memory_space<vmem>>, vector<1x4x256xf32>
    %35 = vector.shape_cast %34 : vector<1x4x256xf32> to vector<4x256xf32>
    %36 = vector.shape_cast %33 : vector<4x256xf32> to vector<1x4x256xf32>
    tpu.vector_store %arg10[%c0_26, %c0_27, %c0_28], %36 {strides = array<i32>} : memref<1x4x256xf32, #tpu.memory_space<vmem>>, vector<1x4x256xf32>,
    return
  }
  func.func @transform_0(%arg0: i32) -> (i32, i32, i32) {
    %c0_i32 = arith.constant 0 : i32
    %c0_i32_0 = arith.constant 0 : i32
    %c0_i32_1 = arith.constant 0 : i32
    return %arg0, %c0_i32, %c0_i32_0 : i32, i32, i32
  }
  func.func @transform_1(%arg0: i32) -> (i32, i32, i32) {
    %c0_i32 = arith.constant 0 : i32
    %c0_i32_0 = arith.constant 0 : i32
    %c0_i32_1 = arith.constant 0 : i32
    return %arg0, %c0_i32, %c0_i32_0 : i32, i32, i32
  }
  func.func @transform_2(%arg0: i32) -> (i32, i32, i32) {
    %c0_i32 = arith.constant 0 : i32
    %c0_i32_0 = arith.constant 0 : i32
    %c0_i32_1 = arith.constant 0 : i32
    return %arg0, %c0_i32, %c0_i32_0 : i32, i32, i32
  }
  func.func @transform_3(%arg0: i32) -> (i32, i32) {
    %c0_i32 = arith.constant 0 : i32
    %c0_i32_0 = arith.constant 0 : i32
    %c0_i32_1 = arith.constant 0 : i32
    return %c0_i32, %c0_i32_0 : i32, i32
  }
  func.func @transform_4(%arg0: i32) -> (i32, i32) {
    %c0_i32 = arith.constant 0 : i32
    %c0_i32_0 = arith.constant 0 : i32
    %c0_i32_1 = arith.constant 0 : i32
    return %c0_i32, %c0_i32_0 : i32, i32
  }
  func.func @transform_5(%arg0: i32) -> (i32, i32) {
    %c0_i32 = arith.constant 0 : i32
    %c0_i32_0 = arith.constant 0 : i32
    %c0_i32_1 = arith.constant 0 : i32
    return %c0_i32, %c0_i32_0 : i32, i32
  }
  func.func @transform_6(%arg0: i32) -> (i32, i32) {
    %c0_i32 = arith.constant 0 : i32
    %c0_i32_0 = arith.constant 0 : i32
    %c0_i32_1 = arith.constant 0 : i32
    return %c0_i32, %c0_i32_0 : i32, i32
  }
  func.func @transform_7(%arg0: i32) -> (i32, i32) {
    %c0_i32 = arith.constant 0 : i32
    %c0_i32_0 = arith.constant 0 : i32
    %c0_i32_1 = arith.constant 0 : i32
    return %c0_i32, %c0_i32_0 : i32, i32
  }
  func.func @transform_8(%arg0: i32) -> (i32, i32) {
    %c0_i32 = arith.constant 0 : i32
    %c0_i32_0 = arith.constant 0 : i32
    %c0_i32_1 = arith.constant 0 : i32
    return %c0_i32, %c0_i32_0 : i32, i32
  }
  func.func @transform_9(%arg0: i32) -> (i32, i32, i32) {
    %c0_i32 = arith.constant 0 : i32
    %c0_i32_0 = arith.constant 0 : i32
    %c0_i32_1 = arith.constant 0 : i32
    return %arg0, %c0_i32, %c0_i32_0 : i32, i32, i32
  }
}

</mosaic_0001>

<llo_original>
// kernel: bpa_forward.1
$region0: #{bpa_forward.1}
  #allocation0 [shape = 'u32[]', space=smem, size = 0x4, offset = 0x4, fixed_abs, tag = 'smem constant byte address 0x4 - core index']
  #allocation1 [shape = 'u32[144,128]{1,0:T(1,128)}', space=vmem, size = 0x12000, scoped, tag = 'internal scratch']
  %s0 = inlined_call_operand.vmem [shape: f32[2,9,256], index: 0, kind: input, shape index: {}]
  %s1 = inlined_call_operand.vmem [shape: f32[2,4,256], index: 1, kind: input, shape index: {}]
  %s2 = inlined_call_operand.vmem [shape: bf16[2,4,1024], index: 2, kind: input, shape index: {}]
  %s3 = inlined_call_operand.vmem [shape: f32[4,256], index: 3, kind: input, shape index: {}]
  %s4 = inlined_call_operand.vmem [shape: f32[256,256], index: 4, kind: input, shape index: {}]
  %s5 = inlined_call_operand.vmem [shape: bf16[1024,256], index: 5, kind: input, shape index: {}]
  %s6 = inlined_call_operand.vmem [shape: f32[4,4], index: 6, kind: input, shape index: {}]
  %s7 = inlined_call_operand.vmem [shape: f32[4,4], index: 7, kind: input, shape index: {}]
  %s8 = inlined_call_operand.vmem [shape: f32[4,1], index: 8, kind: input, shape index: {}]
  %s9 = inlined_call_operand.vmem [shape: f32[2,4,256], index: 9, kind: output, shape index: {}]
  %s10 = sld [smem:[#allocation0]]
  $region69: #{bpa_forward.1} parent=0
    _
  %s12 = ssub.s32 1, %s10
  %s13 = scalar_select 0, %s12, %s10
  loop: start=0, step=1, limit=4
  $region2: #{bpa_forward.1} parent=0 // loop_pre_header
    _
  $region3: #{bpa_forward.1} parent=0 // loop_header
    %s15 = sphi 0, %s19
    %p16 = scmp.ge.s32.totalorder %s15, 4
    %s25 = sphi 0, %s27
    %s28 = sphi 0, %s25
    %s29 = sphi 0, %s28
    %s45 = sphi 0, %s29
    %s51 = sphi 0, %s53
    %s54 = sphi 0, %s51
    %s55 = sphi 0, %s54
    %s71 = sphi 0, %s55
    %s77 = sphi 0, %s79
    %s80 = sphi 0, %s77
    %s81 = sphi 0, %s80
    %s97 = sphi 0, %s81
    %s101 = sphi 0, %s101
    %s103 = sphi 0, %s101
    %s104 = sphi 0, %s103
    %s118 = sphi 0, %s104
    %s122 = sphi 0, %s122
    %s124 = sphi 0, %s122
    %s125 = sphi 0, %s124
    %s139 = sphi 0, %s125
    %s143 = sphi 0, %s143
    %s145 = sphi 0, %s143
    %s146 = sphi 0, %s145
    %s160 = sphi 0, %s146
    %s164 = sphi 0, %s164
    %s166 = sphi 0, %s164
    %s167 = sphi 0, %s166
    %s181 = sphi 0, %s167
    %s185 = sphi 0, %s185
    %s187 = sphi 0, %s185
    %s188 = sphi 0, %s187
    %s202 = sphi 0, %s188
    %s206 = sphi 0, %s206
    %s208 = sphi 0, %s206
    %s209 = sphi 0, %s208
    %s223 = sphi 0, %s209
    %s229 = sphi 0, %s231
    %s232 = sphi 0, %s229
    %s233 = sphi 0, %s232
    %s249 = sphi 0, %s233
  $region4: #{bpa_forward.1} parent=0 // loop_header_branch
    %18 = sbr.rel (%p16) target = $region8
  $region5: #{bpa_forward.1} parent=0 // loop_body
    %s20 = ssub.s32 %s15, 1
    %s21 = ssub.s32 %s15, 2
    %s22 = sadd.s32 %s15, 1
    %s23 = ssub.s32 %s15, %s22
    %p24 = scmp.eq.s32.totalorder %s23, 0
    %s26 = sadd.s32 %s25, 1
    %s27 = scalar_select %p24, %s25, %s26
    %p30 = pneg %p24
    %p31 = scmp.eq.s32.totalorder %s15, 1
    %p32 = por %p30, %p31
    %p33 = scmp.ne.s32.totalorder %s25, %s28
    %p34 = scmp.eq.s32.totalorder %s15, 0
    %p35 = por %p33, %p34
    %p36 = scmp.ne.s32.totalorder %s25, %s28
    %p37 = scmp.eq.s32.totalorder %s20, 1
    %p38 = por %p36, %p37
    %p39 = scmp.ne.s32.totalorder %s28, %s29
    %p40 = scmp.eq.s32.totalorder %s20, 0
    %p41 = por %p39, %p40
    %p42 = scmp.ne.s32.totalorder %s28, %s29
    %p43 = scmp.eq.s32.totalorder %s21, 1
    %p44 = por %p42, %p43
    %p46 = scmp.ne.s32.totalorder %s29, %s45
    %p47 = scmp.eq.s32.totalorder %s21, 0
    %p48 = por %p46, %p47
    %s49 = ssub.s32 %s15, %s22
    %p50 = scmp.eq.s32.totalorder %s49, 0
    %s52 = sadd.s32 %s51, 1
    %s53 = scalar_select %p50, %s51, %s52
    %p56 = pneg %p50
    %p57 = scmp.eq.s32.totalorder %s15, 1
    %p58 = por %p56, %p57
    %p59 = scmp.ne.s32.totalorder %s51, %s54
    %p60 = scmp.eq.s32.totalorder %s15, 0
    %p61 = por %p59, %p60
    %p62 = scmp.ne.s32.totalorder %s51, %s54
    %p63 = scmp.eq.s32.totalorder %s20, 1
    %p64 = por %p62, %p63
    %p65 = scmp.ne.s32.totalorder %s54, %s55
    %p66 = scmp.eq.s32.totalorder %s20, 0
    %p67 = por %p65, %p66
    %p68 = scmp.ne.s32.totalorder %s54, %s55
    %p69 = scmp.eq.s32.totalorder %s21, 1
    %p70 = por %p68, %p69
    %p72 = scmp.ne.s32.totalorder %s55, %s71
    %p73 = scmp.eq.s32.totalorder %s21, 0
    %p74 = por %p72, %p73
    %s75 = ssub.s32 %s15, %s22
    %p76 = scmp.eq.s32.totalorder %s75, 0
    %s78 = sadd.s32 %s77, 1
    %s79 = scalar_select %p76, %s77, %s78
    %p82 = pneg %p76
    %p83 = scmp.eq.s32.totalorder %s15, 1
    %p84 = por %p82, %p83
    %p85 = scmp.ne.s32.totalorder %s77, %s80
    %p86 = scmp.eq.s32.totalorder %s15, 0
    %p87 = por %p85, %p86
    %p88 = scmp.ne.s32.totalorder %s77, %s80
    %p89 = scmp.eq.s32.totalorder %s20, 1
    %p90 = por %p88, %p89
    %p91 = scmp.ne.s32.totalorder %s80, %s81
    %p92 = scmp.eq.s32.totalorder %s20, 0
    %p93 = por %p91, %p92
    %p94 = scmp.ne.s32.totalorder %s80, %s81
    %p95 = scmp.eq.s32.totalorder %s21, 1
    %p96 = por %p94, %p95
    %p98 = scmp.ne.s32.totalorder %s81, %s97
    %p99 = scmp.eq.s32.totalorder %s21, 0
    %p100 = por %p98, %p99
    %s102 = sadd.s32 %s101, 1
    %p105 = scmp.eq.s32.totalorder %s15, 1
    %p106 = scmp.ne.s32.totalorder %s101, %s103
    %p107 = scmp.eq.s32.totalorder %s15, 0
    %p108 = por %p106, %p107
    %p109 = scmp.ne.s32.totalorder %s101, %s103
    %p110 = scmp.eq.s32.totalorder %s20, 1
    %p111 = por %p109, %p110
    %p112 = scmp.ne.s32.totalorder %s103, %s104
    %p113 = scmp.eq.s32.totalorder %s20, 0
    %p114 = por %p112, %p113
    %p115 = scmp.ne.s32.totalorder %s103, %s104
    %p116 = scmp.eq.s32.totalorder %s21, 1
    %p117 = por %p115, %p116
    %p119 = scmp.ne.s32.totalorder %s104, %s118
    %p120 = scmp.eq.s32.totalorder %s21, 0
    %p121 = por %p119, %p120
    %s123 = sadd.s32 %s122, 1
    %p126 = scmp.eq.s32.totalorder %s15, 1
    %p127 = scmp.ne.s32.totalorder %s122, %s124
    %p128 = scmp.eq.s32.totalorder %s15, 0
    %p129 = por %p127, %p128
    %p130 = scmp.ne.s32.totalorder %s122, %s124
    %p131 = scmp.eq.s32.totalorder %s20, 1
    %p132 = por %p130, %p131
    %p133 = scmp.ne.s32.totalorder %s124, %s125
    %p134 = scmp.eq.s32.totalorder %s20, 0
    %p135 = por %p133, %p134
    %p136 = scmp.ne.s32.totalorder %s124, %s125
    %p137 = scmp.eq.s32.totalorder %s21, 1
    %p138 = por %p136, %p137
    %p140 = scmp.ne.s32.totalorder %s125, %s139
    %p141 = scmp.eq.s32.totalorder %s21, 0
    %p142 = por %p140, %p141
    %s144 = sadd.s32 %s143, 1
    %p147 = scmp.eq.s32.totalorder %s15, 1
    %p148 = scmp.ne.s32.totalorder %s143, %s145
    %p149 = scmp.eq.s32.totalorder %s15, 0
    %p150 = por %p148, %p149
    %p151 = scmp.ne.s32.totalorder %s143, %s145
    %p152 = scmp.eq.s32.totalorder %s20, 1
    %p153 = por %p151, %p152
    %p154 = scmp.ne.s32.totalorder %s145, %s146
    %p155 = scmp.eq.s32.totalorder %s20, 0
    %p156 = por %p154, %p155
    %p157 = scmp.ne.s32.totalorder %s145, %s146
    %p158 = scmp.eq.s32.totalorder %s21, 1
    %p159 = por %p157, %p158
    %p161 = scmp.ne.s32.totalorder %s146, %s160
    %p162 = scmp.eq.s32.totalorder %s21, 0
    %p163 = por %p161, %p162
    %s165 = sadd.s32 %s164, 1
    %p168 = scmp.eq.s32.totalorder %s15, 1
    %p169 = scmp.ne.s32.totalorder %s164, %s166
    %p170 = scmp.eq.s32.totalorder %s15, 0
    %p171 = por %p169, %p170
    %p172 = scmp.ne.s32.totalorder %s164, %s166
    %p173 = scmp.eq.s32.totalorder %s20, 1
    %p174 = por %p172, %p173
    %p175 = scmp.ne.s32.totalorder %s166, %s167
    %p176 = scmp.eq.s32.totalorder %s20, 0
    %p177 = por %p175, %p176
    %p178 = scmp.ne.s32.totalorder %s166, %s167
    %p179 = scmp.eq.s32.totalorder %s21, 1
    %p180 = por %p178, %p179
    %p182 = scmp.ne.s32.totalorder %s167, %s181
    %p183 = scmp.eq.s32.totalorder %s21, 0
    %p184 = por %p182, %p183
    %s186 = sadd.s32 %s185, 1
    %p189 = scmp.eq.s32.totalorder %s15, 1
    %p190 = scmp.ne.s32.totalorder %s185, %s187
    %p191 = scmp.eq.s32.totalorder %s15, 0
    %p192 = por %p190, %p191
    %p193 = scmp.ne.s32.totalorder %s185, %s187
    %p194 = scmp.eq.s32.totalorder %s20, 1
    %p195 = por %p193, %p194
    %p196 = scmp.ne.s32.totalorder %s187, %s188
    %p197 = scmp.eq.s32.totalorder %s20, 0
    %p198 = por %p196, %p197
    %p199 = scmp.ne.s32.totalorder %s187, %s188
    %p200 = scmp.eq.s32.totalorder %s21, 1
    %p201 = por %p199, %p200
    %p203 = scmp.ne.s32.totalorder %s188, %s202
    %p204 = scmp.eq.s32.totalorder %s21, 0
    %p205 = por %p203, %p204
    %s207 = sadd.s32 %s206, 1
    %p210 = scmp.eq.s32.totalorder %s15, 1
    %p211 = scmp.ne.s32.totalorder %s206, %s208
    %p212 = scmp.eq.s32.totalorder %s15, 0
    %p213 = por %p211, %p212
    %p214 = scmp.ne.s32.totalorder %s206, %s208
    %p215 = scmp.eq.s32.totalorder %s20, 1
    %p216 = por %p214, %p215
    %p217 = scmp.ne.s32.totalorder %s208, %s209
    %p218 = scmp.eq.s32.totalorder %s20, 0
    %p219 = por %p217, %p218
    %p220 = scmp.ne.s32.totalorder %s208, %s209
    %p221 = scmp.eq.s32.totalorder %s21, 1
    %p222 = por %p220, %p221
    %p224 = scmp.ne.s32.totalorder %s209, %s223
    %p225 = scmp.eq.s32.totalorder %s21, 0
    %p226 = por %p224, %p225
    %s227 = ssub.s32 %s15, %s22
    %p228 = scmp.eq.s32.totalorder %s227, 0
    %s230 = sadd.s32 %s229, 1
    %s231 = scalar_select %p228, %s229, %s230
    %p234 = pneg %p228
    %p235 = scmp.eq.s32.totalorder %s15, 1
    %p236 = por %p234, %p235
    %p237 = scmp.ne.s32.totalorder %s229, %s232
    %p238 = scmp.eq.s32.totalorder %s15, 0
    %p239 = por %p237, %p238
    %p240 = scmp.ne.s32.totalorder %s229, %s232
    %p241 = scmp.eq.s32.totalorder %s20, 1
    %p242 = por %p240, %p241
    %p243 = scmp.ne.s32.totalorder %s232, %s233
    %p244 = scmp.eq.s32.totalorder %s20, 0
    %p245 = por %p243, %p244
    %p246 = scmp.ne.s32.totalorder %s232, %s233
    %p247 = scmp.eq.s32.totalorder %s21, 1
    %p248 = por %p246, %p247
    %p250 = scmp.ne.s32.totalorder %s233, %s249
    %p251 = scmp.eq.s32.totalorder %s21, 0
    %p252 = por %p250, %p251
    %p253 = scmp.le.s32.totalorder 1, %s15
    %p254 = scmp.lt.s32.totalorder %s15, 3
    %p255 = pnand %p253, %p254
    %p256 = pneg %p255
    // Predicated region
    $region9: #{bpa_forward.1} parent=5 // pred_check
      _
    $region10: #{bpa_forward.1} parent=5 // pred_check_branch
      %258 = sbr.rel (%p255) target = $region12
    $region11: #{bpa_forward.1} parent=5 // pred_region
      %s259 = ssub.s32 %s15, 1
      // Predicated region
      $region13: #{bpa_forward.1} parent=11 // pred_check
        %p260 = pneg %p114
      $region14: #{bpa_forward.1} parent=11 // pred_check_branch
        %262 = sbr.rel (%p260) target = $region16
      $region15: #{bpa_forward.1} parent=11 // pred_region
        _
      $region16: #{bpa_forward.1} parent=11 // pred_fallthru
        _
      // Predicated region
      $region17: #{bpa_forward.1} parent=11 // pred_check
        %p263 = pneg %p135
      $region18: #{bpa_forward.1} parent=11 // pred_check_branch
        %265 = sbr.rel (%p263) target = $region20
      $region19: #{bpa_forward.1} parent=11 // pred_region
        _
      $region20: #{bpa_forward.1} parent=11 // pred_fallthru
        _
      // Predicated region
      $region21: #{bpa_forward.1} parent=11 // pred_check
        %p266 = pneg %p156
      $region22: #{bpa_forward.1} parent=11 // pred_check_branch
        %268 = sbr.rel (%p266) target = $region24
      $region23: #{bpa_forward.1} parent=11 // pred_region
        _
      $region24: #{bpa_forward.1} parent=11 // pred_fallthru
        _
      // Predicated region
      $region25: #{bpa_forward.1} parent=11 // pred_check
        %p269 = pneg %p177
      $region26: #{bpa_forward.1} parent=11 // pred_check_branch
        %271 = sbr.rel (%p269) target = $region28
      $region27: #{bpa_forward.1} parent=11 // pred_region
        _
      $region28: #{bpa_forward.1} parent=11 // pred_fallthru
        _
      // Predicated region
      $region29: #{bpa_forward.1} parent=11 // pred_check
        %p272 = pneg %p198
      $region30: #{bpa_forward.1} parent=11 // pred_check_branch
        %274 = sbr.rel (%p272) target = $region32
      $region31: #{bpa_forward.1} parent=11 // pred_region
        _
      $region32: #{bpa_forward.1} parent=11 // pred_fallthru
        _
      // Predicated region
      $region33: #{bpa_forward.1} parent=11 // pred_check
        %p275 = pneg %p219
      $region34: #{bpa_forward.1} parent=11 // pred_check_branch
        %277 = sbr.rel (%p275) target = $region36
      $region35: #{bpa_forward.1} parent=11 // pred_region
        _
      $region36: #{bpa_forward.1} parent=11 // pred_fallthru
        _
    $region12: #{bpa_forward.1} parent=5 // pred_fallthru
      _
    %p278 = scmp.lt.s32.totalorder %s15, 2
    // Predicated region
    $region37: #{bpa_forward.1} parent=5 // pred_check
      %p279 = pneg %p278
    $region38: #{bpa_forward.1} parent=5 // pred_check_branch
      %281 = sbr.rel (%p279) target = $region40
    $region39: #{bpa_forward.1} parent=5 // pred_region
      // Predicated region
      $region41: #{bpa_forward.1} parent=39 // pred_check
        %p282 = pneg %p35
      $region42: #{bpa_forward.1} parent=39 // pred_check_branch
        %284 = sbr.rel (%p282) target = $region44
      $region43: #{bpa_forward.1} parent=39 // pred_region
        %p285 = scmp.lt.s32.totalorder %s15, 1
        %s286 = scalar_select %p285, %s15, 1
        %s287 = smul.addr %s286, 4
        %s288 = smul.addr %s287, 8
        %s289 = scalar_lea.vmem %s0, %s288
      $region44: #{bpa_forward.1} parent=39 // pred_fallthru
        _
      // Predicated region
      $region45: #{bpa_forward.1} parent=39 // pred_check
        %p290 = pneg %p61
      $region46: #{bpa_forward.1} parent=39 // pred_check_branch
        %292 = sbr.rel (%p290) target = $region48
      $region47: #{bpa_forward.1} parent=39 // pred_region
        %p293 = scmp.lt.s32.totalorder %s15, 1
        %s294 = scalar_select %p293, %s15, 1
        %s295 = smul.addr %s294, 2
        %s296 = smul.addr %s295, 4
        %s297 = scalar_lea.vmem %s1, %s296
      $region48: #{bpa_forward.1} parent=39 // pred_fallthru
        _
      // Predicated region
      $region49: #{bpa_forward.1} parent=39 // pred_check
        %p298 = pneg %p87
      $region50: #{bpa_forward.1} parent=39 // pred_check_branch
        %300 = sbr.rel (%p298) target = $region52
      $region51: #{bpa_forward.1} parent=39 // pred_region
        %p301 = scmp.lt.s32.totalorder %s15, 1
        %s302 = scalar_select %p301, %s15, 1
        %s303 = smul.addr %s302, 8
        %s304 = smul.addr %s303, 2
        %s305 = scalar_lea.vmem %s2, %s304
      $region52: #{bpa_forward.1} parent=39 // pred_fallthru
        _
    $region40: #{bpa_forward.1} parent=5 // pred_fallthru
      _
    %p306 = scmp.le.s32.totalorder 1, %s15
    %p307 = scmp.lt.s32.totalorder %s15, 3
    %p308 = pnand %p306, %p307
    %p309 = pneg %p308
    // Predicated region
    $region53: #{bpa_forward.1} parent=5 // pred_check
      _
    $region54: #{bpa_forward.1} parent=5 // pred_check_branch
      %311 = sbr.rel (%p308) target = $region56
    $region55: #{bpa_forward.1} parent=5 // pred_region
      %s312 = ssub.s32 %s15, 1
      %p313 = scmp.lt.s32.totalorder %s20, 1
      %s314 = scalar_select %p313, %s20, 1
      %s315 = smul.addr %s314, 4
      %s316 = smul.addr %s315, 8
      %s317 = scalar_lea.vmem %s0, %s316
      %p318 = pneg %p41
      %p319 = pneg %p38
      %p320 = scmp.lt.s32.totalorder %s20, 1
      %s321 = scalar_select %p320, %s20, 1
      %s322 = smul.addr %s321, 2
      %s323 = smul.addr %s322, 4
      %s324 = scalar_lea.vmem %s1, %s323
      %p325 = pneg %p67
      %p326 = pneg %p64
      %p327 = scmp.lt.s32.totalorder %s20, 1
      %s328 = scalar_select %p327, %s20, 1
      %s329 = smul.addr %s328, 8
      %s330 = smul.addr %s329, 2
      %s331 = scalar_lea.vmem %s2, %s330
      %p332 = pneg %p93
      %p333 = pneg %p90
      %p334 = pneg %p114
      %p335 = pneg %p111
      %p336 = pneg %p135
      %p337 = pneg %p132
      %p338 = pneg %p156
      %p339 = pneg %p153
      %p340 = pneg %p177
      %p341 = pneg %p174
      %p342 = pneg %p198
      %p343 = pneg %p195
      %p344 = pneg %p219
      %p345 = pneg %p216
      %p346 = pneg %p245
      %p347 = pneg %p242
      %p348 = scmp.lt.s32.totalorder %s20, 1
      %s349 = scalar_select %p348, %s20, 1
      %s350 = smul.addr %s349, 2
      %s351 = smul.addr %s350, 4
      %s352 = scalar_lea.vmem %s9, %s351
      %p353 = scmp.lt.s32.totalorder %s20, 1
      %s354 = scalar_select %p353, %s20, 1
      %s355 = smul.addr %s354, 4
      %s356 = smul.addr %s355, 8
      %s357 = scalar_lea.vmem %s0, %s356
      %p358 = scmp.lt.s32.totalorder %s20, 1
      %s359 = scalar_select %p358, %s20, 1
      %s360 = smul.addr %s359, 2
      %s361 = smul.addr %s360, 4
      %s362 = scalar_lea.vmem %s1, %s361
      %p363 = scmp.lt.s32.totalorder %s20, 1
      %s364 = scalar_select %p363, %s20, 1
      %s365 = smul.addr %s364, 8
      %s366 = smul.addr %s365, 2
      %s367 = scalar_lea.vmem %s2, %s366
      %p368 = scmp.lt.s32.totalorder %s20, 1
      %s369 = scalar_select %p368, %s20, 1
      %s370 = smul.addr %s369, 2
      %s371 = smul.addr %s370, 4
      %s372 = scalar_lea.vmem %s9, %s371
      %v373 = vld [vmem:[%s357] sm:$0xff]
      %v374 = vld [vmem:[%s357 + $0x8] sm:$0xff]
      %v375 = vld [vmem:[%s357 + $0x10] sm:$0x1]
      %v376 = vld [vmem:[%s357 + $0x18] sm:$0x1]
      %v377 = vmax.f32 %v373, %v374
      %378 = vmax.xlane.f32.xlu0 %v377
      %v379 = vpop.xlane.xlu0 %378
      %vm380 = vcmask 1040384
      %v381 = vsel %vm380, %v375, -inf
      %v382 = vsel %vm380, %v376, -inf
      %v383 = vmax.f32 %v381, %v382
      %384 = vmax.xlane.f32.xlu0 %v383
      %v385 = vpop.xlane.xlu0 %384
      %v386 = vsub.f32 %v373, %v379
      %v387 = vsub.f32 %v374, %v379
      %v388 = vsub.f32 %v375, %v385
      %v389 = vsub.f32 %v376, %v385
      %v390 = vmul.f32 %v386, 1.442695
      %v391 = vpow.pop %v390
      %v392 = vmul.f32 %v387, 1.442695
      %v393 = vpow.pop %v392
      %v394 = vmul.f32 %v388, 1.442695
      %v395 = vpow.pop %v394
      %v396 = vmul.f32 %v389, 1.442695
      %v397 = vpow.pop %v396
      %v398 = vadd.f32 %v391, %v393
      %399 = vadd.xlane.f32.xlu0 %v398
      %v400 = vpop.xlane.xlu0 %399
      %v401 = vsel %vm380, %v395, 0.0
      %v402 = vsel %vm380, %v397, 0.0
      %v403 = vadd.f32 %v401, %v402
      %404 = vadd.xlane.f32.xlu0 %v403
      %v405 = vpop.xlane.xlu0 %404
      %v406 = vrcp.pop %v400
      %v407 = vrcp.pop %v405
      %v408 = vmul.f32 %v391, %v406
      %v409 = vmul.f32 %v393, %v406
      %v410 = vmul.f32 %v395, %v407
      %v411 = vmul.f32 %v397, %v407
      %v412 = vsel %vm380, %v410, 0.0
      %v413 = vadd.f32 %v408, %v412
      %v414 = vrot.slane %v413, 4
      %v415 = vadd.f32 %v413, %v414
      %v416 = vrot.slane %v415, 2
      %v417 = vadd.f32 %v415, %v416
      %v418 = vrot.slane %v417, 1
      %v419 = vadd.f32 %v417, %v418
      %v420 = vsel %vm380, %v411, 0.0
      %v421 = vadd.f32 %v409, %v420
      %v422 = vrot.slane %v421, 4
      %v423 = vadd.f32 %v421, %v422
      %v424 = vrot.slane %v423, 2
      %v425 = vadd.f32 %v423, %v424
      %v426 = vrot.slane %v425, 1
      %v427 = vadd.f32 %v425, %v426
      %v428 = vld [vmem:[%s3] sm:$0xff]
      %v431 = vcombine.low %v419, %v427
      %v433 = vmul.f32 %v428, %v431
      %v434 = vld [vmem:[%s4] sm:$0xff]
      %v435 = vld [vmem:[%s4 + $0x8] sm:$0xff]
      %v436 = vld [vmem:[%s4 + $0x10] sm:$0xff]
      %v437 = vld [vmem:[%s4 + $0x18] sm:$0xff]
      %v438 = vld [vmem:[%s4 + $0x20] sm:$0xff]
      %v439 = vld [vmem:[%s4 + $0x28] sm:$0xff]
      %v440 = vld [vmem:[%s4 + $0x30] sm:$0xff]
      %v441 = vld [vmem:[%s4 + $0x38] sm:$0xff]
      %v442 = vld [vmem:[%s4 + $0x40] sm:$0xff]
      %v443 = vld [vmem:[%s4 + $0x48] sm:$0xff]
      %v444 = vld [vmem:[%s4 + $0x50] sm:$0xff]
      %v445 = vld [vmem:[%s4 + $0x58] sm:$0xff]
      %v446 = vld [vmem:[%s4 + $0x60] sm:$0xff]
      %v447 = vld [vmem:[%s4 + $0x68] sm:$0xff]
      %v448 = vld [vmem:[%s4 + $0x70] sm:$0xff]
      %v449 = vld [vmem:[%s4 + $0x78] sm:$0xff]
      %v450 = vld [vmem:[%s4 + $0x80] sm:$0xff]
      %v451 = vld [vmem:[%s4 + $0x88] sm:$0xff]
      %v452 = vld [vmem:[%s4 + $0x90] sm:$0xff]
      %v453 = vld [vmem:[%s4 + $0x98] sm:$0xff]
      %v454 = vld [vmem:[%s4 + $0xa0] sm:$0xff]
      %v455 = vld [vmem:[%s4 + $0xa8] sm:$0xff]
      %v456 = vld [vmem:[%s4 + $0xb0] sm:$0xff]
      %v457 = vld [vmem:[%s4 + $0xb8] sm:$0xff]
      %v458 = vld [vmem:[%s4 + $0xc0] sm:$0xff]
      %v459 = vld [vmem:[%s4 + $0xc8] sm:$0xff]
      %v460 = vld [vmem:[%s4 + $0xd0] sm:$0xff]
      %v461 = vld [vmem:[%s4 + $0xd8] sm:$0xff]
      %v462 = vld [vmem:[%s4 + $0xe0] sm:$0xff]
      %v463 = vld [vmem:[%s4 + $0xe8] sm:$0xff]
      %v464 = vld [vmem:[%s4 + $0xf0] sm:$0xff]
      %v465 = vld [vmem:[%s4 + $0xf8] sm:$0xff]
      %v466 = vld [vmem:[%s4 + $0x100] sm:$0xff]
      %v467 = vld [vmem:[%s4 + $0x108] sm:$0xff]
      %v468 = vld [vmem:[%s4 + $0x110] sm:$0xff]
      %v469 = vld [vmem:[%s4 + $0x118] sm:$0xff]
      %v470 = vld [vmem:[%s4 + $0x120] sm:$0xff]
      %v471 = vld [vmem:[%s4 + $0x128] sm:$0xff]
      %v472 = vld [vmem:[%s4 + $0x130] sm:$0xff]
      %v473 = vld [vmem:[%s4 + $0x138] sm:$0xff]
      %v474 = vld [vmem:[%s4 + $0x140] sm:$0xff]
      %v475 = vld [vmem:[%s4 + $0x148] sm:$0xff]
      %v476 = vld [vmem:[%s4 + $0x150] sm:$0xff]
      %v477 = vld [vmem:[%s4 + $0x158] sm:$0xff]
      %v478 = vld [vmem:[%s4 + $0x160] sm:$0xff]
      %v479 = vld [vmem:[%s4 + $0x168] sm:$0xff]
      %v480 = vld [vmem:[%s4 + $0x170] sm:$0xff]
      %v481 = vld [vmem:[%s4 + $0x178] sm:$0xff]
      %v482 = vld [vmem:[%s4 + $0x180] sm:$0xff]
      %v483 = vld [vmem:[%s4 + $0x188] sm:$0xff]
      %v484 = vld [vmem:[%s4 + $0x190] sm:$0xff]
      %v485 = vld [vmem:[%s4 + $0x198] sm:$0xff]
      %v486 = vld [vmem:[%s4 + $0x1a0] sm:$0xff]
      %v487 = vld [vmem:[%s4 + $0x1a8] sm:$0xff]
      %v488 = vld [vmem:[%s4 + $0x1b0] sm:$0xff]
      %v489 = vld [vmem:[%s4 + $0x1b8] sm:$0xff]
      %v490 = vld [vmem:[%s4 + $0x1c0] sm:$0xff]
      %v491 = vld [vmem:[%s4 + $0x1c8] sm:$0xff]
      %v492 = vld [vmem:[%s4 + $0x1d0] sm:$0xff]
      %v493 = vld [vmem:[%s4 + $0x1d8] sm:$0xff]
      %v494 = vld [vmem:[%s4 + $0x1e0] sm:$0xff]
      %v495 = vld [vmem:[%s4 + $0x1e8] sm:$0xff]
      %v496 = vld [vmem:[%s4 + $0x1f0] sm:$0xff]
      %v497 = vld [vmem:[%s4 + $0x1f8] sm:$0xff]
      %v498 = vld [vmem:[%s362] sm:$0xff]
      %v500 = vcombine.high %v433, %v433
      %v503 = vcombine.high %v498, %v498
      %505 = vmatprep.subr.mxu0 %v465
      %506 = vmatpush1.msra.mxu0 %v464
      %507 = vmatprep.subr.mxu0 %v463
      %508 = vmatpush1.msra.mxu0 %v462
      %509 = vmatprep.subr.mxu0 %v461
      %510 = vmatpush1.msra.mxu0 %v460
      %511 = vmatprep.subr.mxu0 %v459
      %512 = vmatpush1.msra.mxu0 %v458
      %513 = vmatprep.subr.mxu0 %v457
      %514 = vmatpush1.msra.mxu0 %v456
      %515 = vmatprep.subr.mxu0 %v455
      %516 = vmatpush1.msra.mxu0 %v454
      %517 = vmatprep.subr.mxu0 %v453
      %518 = vmatpush1.msra.mxu0 %v452
      %519 = vmatprep.subr.mxu0 %v451
      %520 = vmatpush1.msra.mxu0 %v450
      %521 = vmatprep.subr.mxu0 %v449
      %522 = vmatpush1.msra.mxu0 %v448
      %523 = vmatprep.subr.mxu0 %v447
      %524 = vmatpush1.msra.mxu0 %v446
      %525 = vmatprep.subr.mxu0 %v445
      %526 = vmatpush1.msra.mxu0 %v444
      %527 = vmatprep.subr.mxu0 %v443
      %528 = vmatpush1.msra.mxu0 %v442
      %529 = vmatprep.subr.mxu0 %v441
      %530 = vmatpush1.msra.mxu0 %v440
      %531 = vmatprep.subr.mxu0 %v439
      %532 = vmatpush1.msra.mxu0 %v438
      %533 = vmatprep.subr.mxu0 %v437
      %534 = vmatpush1.msra.mxu0 %v436
      %535 = vmatprep.subr.mxu0 %v435
      %536 = vmatpush1.msra.mxu0 %v434
      %537 = vmatprep.subr.mxu0 %v497
      %538 = vmatpush2.msra.mxu0 %v496
      %539 = vmatprep.subr.mxu0 %v495
      %540 = vmatpush2.msra.mxu0 %v494
      %541 = vmatprep.subr.mxu0 %v493
      %542 = vmatpush2.msra.mxu0 %v492
      %543 = vmatprep.subr.mxu0 %v491
      %544 = vmatpush2.msra.mxu0 %v490
      %545 = vmatprep.subr.mxu0 %v489
      %546 = vmatpush2.msra.mxu0 %v488
      %547 = vmatprep.subr.mxu0 %v487
      %548 = vmatpush2.msra.mxu0 %v486
      %549 = vmatprep.subr.mxu0 %v485
      %550 = vmatpush2.msra.mxu0 %v484
      %551 = vmatprep.subr.mxu0 %v483
      %552 = vmatpush2.msra.mxu0 %v482
      %553 = vmatprep.subr.mxu0 %v481
      %554 = vmatpush2.msra.mxu0 %v480
      %555 = vmatprep.subr.mxu0 %v479
      %556 = vmatpush2.msra.mxu0 %v478
      %557 = vmatprep.subr.mxu0 %v477
      %558 = vmatpush2.msra.mxu0 %v476
      %559 = vmatprep.subr.mxu0 %v475
      %560 = vmatpush2.msra.mxu0 %v474
      %561 = vmatprep.subr.mxu0 %v473
      %562 = vmatpush2.msra.mxu0 %v472
      %563 = vmatprep.subr.mxu0 %v471
      %564 = vmatpush2.msra.mxu0 %v470
      %565 = vmatprep.subr.mxu0 %v469
      %566 = vmatpush2.msra.mxu0 %v468
      %567 = vmatprep.subr.mxu0 %v467
      %568 = vmatpush2.msra.mxu0 %v466
      %569 = vmatprep.mubr.f32.mxu0 %v500
      %570 = vmatmul.mubr.f32.gmra.mxu0 %v433
      %v571 = vpop.f32.mrf.mxu0
      %v572 = vadd.f32 %v498, %v571
      %v573 = vpop.f32.mrf.mxu0
      %v574 = vadd.f32 %v503, %v573
      %575 = vdwg.mxu0
      %v576 = vld [vmem:[%s367] sm:$0xff]
      %v577 = vld [vmem:[%s367 + $0x8] sm:$0xff]
      %v578 = vld [vmem:[%s5] sm:$0xff]
      %v579 = vld [vmem:[%s5 + $0x8] sm:$0xff]
      %v580 = vld [vmem:[%s5 + $0x10] sm:$0xff]
      %v581 = vld [vmem:[%s5 + $0x18] sm:$0xff]
      %v582 = vld [vmem:[%s5 + $0x20] sm:$0xff]
      %v583 = vld [vmem:[%s5 + $0x28] sm:$0xff]
      %v584 = vld [vmem:[%s5 + $0x30] sm:$0xff]
      %v585 = vld [vmem:[%s5 + $0x38] sm:$0xff]
      %v586 = vld [vmem:[%s5 + $0x40] sm:$0xff]
      %v587 = vld [vmem:[%s5 + $0x48] sm:$0xff]
      %v588 = vld [vmem:[%s5 + $0x50] sm:$0xff]
      %v589 = vld [vmem:[%s5 + $0x58] sm:$0xff]
      %v590 = vld [vmem:[%s5 + $0x60] sm:$0xff]
      %v591 = vld [vmem:[%s5 + $0x68] sm:$0xff]
      %v592 = vld [vmem:[%s5 + $0x70] sm:$0xff]
      %v593 = vld [vmem:[%s5 + $0x78] sm:$0xff]
      %v594 = vld [vmem:[%s5 + $0x80] sm:$0xff]
      %v595 = vld [vmem:[%s5 + $0x88] sm:$0xff]
      %v596 = vld [vmem:[%s5 + $0x90] sm:$0xff]
      %v597 = vld [vmem:[%s5 + $0x98] sm:$0xff]
      %v598 = vld [vmem:[%s5 + $0xa0] sm:$0xff]
      %v599 = vld [vmem:[%s5 + $0xa8] sm:$0xff]
      %v600 = vld [vmem:[%s5 + $0xb0] sm:$0xff]
      %v601 = vld [vmem:[%s5 + $0xb8] sm:$0xff]
      %v602 = vld [vmem:[%s5 + $0xc0] sm:$0xff]
      %v603 = vld [vmem:[%s5 + $0xc8] sm:$0xff]
      %v604 = vld [vmem:[%s5 + $0xd0] sm:$0xff]
      %v605 = vld [vmem:[%s5 + $0xd8] sm:$0xff]
      %v606 = vld [vmem:[%s5 + $0xe0] sm:$0xff]
      %v607 = vld [vmem:[%s5 + $0xe8] sm:$0xff]
      %v608 = vld [vmem:[%s5 + $0xf0] sm:$0xff]
      %v609 = vld [vmem:[%s5 + $0xf8] sm:$0xff]
      %v610 = vld [vmem:[%s5 + $0x100] sm:$0xff]
      %v611 = vld [vmem:[%s5 + $0x108] sm:$0xff]
      %v612 = vld [vmem:[%s5 + $0x110] sm:$0xff]
      %v613 = vld [vmem:[%s5 + $0x118] sm:$0xff]
      %v614 = vld [vmem:[%s5 + $0x120] sm:$0xff]
      %v615 = vld [vmem:[%s5 + $0x128] sm:$0xff]
      %v616 = vld [vmem:[%s5 + $0x130] sm:$0xff]
      %v617 = vld [vmem:[%s5 + $0x138] sm:$0xff]
      %v618 = vld [vmem:[%s5 + $0x140] sm:$0xff]
      %v619 = vld [vmem:[%s5 + $0x148] sm:$0xff]
      %v620 = vld [vmem:[%s5 + $0x150] sm:$0xff]
      %v621 = vld [vmem:[%s5 + $0x158] sm:$0xff]
      %v622 = vld [vmem:[%s5 + $0x160] sm:$0xff]
      %v623 = vld [vmem:[%s5 + $0x168] sm:$0xff]
      %v624 = vld [vmem:[%s5 + $0x170] sm:$0xff]
      %v625 = vld [vmem:[%s5 + $0x178] sm:$0xff]
      %v626 = vld [vmem:[%s5 + $0x180] sm:$0xff]
      %v627 = vld [vmem:[%s5 + $0x188] sm:$0xff]
      %v628 = vld [vmem:[%s5 + $0x190] sm:$0xff]
      %v629 = vld [vmem:[%s5 + $0x198] sm:$0xff]
      %v630 = vld [vmem:[%s5 + $0x1a0] sm:$0xff]
      %v631 = vld [vmem:[%s5 + $0x1a8] sm:$0xff]
      %v632 = vld [vmem:[%s5 + $0x1b0] sm:$0xff]
      %v633 = vld [vmem:[%s5 + $0x1b8] sm:$0xff]
      %v634 = vld [vmem:[%s5 + $0x1c0] sm:$0xff]
      %v635 = vld [vmem:[%s5 + $0x1c8] sm:$0xff]
      %v636 = vld [vmem:[%s5 + $0x1d0] sm:$0xff]
      %v637 = vld [vmem:[%s5 + $0x1d8] sm:$0xff]
      %v638 = vld [vmem:[%s5 + $0x1e0] sm:$0xff]
      %v639 = vld [vmem:[%s5 + $0x1e8] sm:$0xff]
      %v640 = vld [vmem:[%s5 + $0x1f0] sm:$0xff]
      %v641 = vld [vmem:[%s5 + $0x1f8] sm:$0xff]
      %v642 = vld [vmem:[%s5 + $0x200] sm:$0xff]
      %v643 = vld [vmem:[%s5 + $0x208] sm:$0xff]
      %v644 = vld [vmem:[%s5 + $0x210] sm:$0xff]
      %v645 = vld [vmem:[%s5 + $0x218] sm:$0xff]
      %v646 = vld [vmem:[%s5 + $0x220] sm:$0xff]
      %v647 = vld [vmem:[%s5 + $0x228] sm:$0xff]
      %v648 = vld [vmem:[%s5 + $0x230] sm:$0xff]
      %v649 = vld [vmem:[%s5 + $0x238] sm:$0xff]
      %v650 = vld [vmem:[%s5 + $0x240] sm:$0xff]
      %v651 = vld [vmem:[%s5 + $0x248] sm:$0xff]
      %v652 = vld [vmem:[%s5 + $0x250] sm:$0xff]
      %v653 = vld [vmem:[%s5 + $0x258] sm:$0xff]
      %v654 = vld [vmem:[%s5 + $0x260] sm:$0xff]
      %v655 = vld [vmem:[%s5 + $0x268] sm:$0xff]
      %v656 = vld [vmem:[%s5 + $0x270] sm:$0xff]
      %v657 = vld [vmem:[%s5 + $0x278] sm:$0xff]
      %v658 = vld [vmem:[%s5 + $0x280] sm:$0xff]
      %v659 = vld [vmem:[%s5 + $0x288] sm:$0xff]
      %v660 = vld [vmem:[%s5 + $0x290] sm:$0xff]
      %v661 = vld [vmem:[%s5 + $0x298] sm:$0xff]
      %v662 = vld [vmem:[%s5 + $0x2a0] sm:$0xff]
      %v663 = vld [vmem:[%s5 + $0x2a8] sm:$0xff]
      %v664 = vld [vmem:[%s5 + $0x2b0] sm:$0xff]
      %v665 = vld [vmem:[%s5 + $0x2b8] sm:$0xff]
      %v666 = vld [vmem:[%s5 + $0x2c0] sm:$0xff]
      %v667 = vld [vmem:[%s5 + $0x2c8] sm:$0xff]
      %v668 = vld [vmem:[%s5 + $0x2d0] sm:$0xff]
      %v669 = vld [vmem:[%s5 + $0x2d8] sm:$0xff]
      %v670 = vld [vmem:[%s5 + $0x2e0] sm:$0xff]
      %v671 = vld [vmem:[%s5 + $0x2e8] sm:$0xff]
      %v672 = vld [vmem:[%s5 + $0x2f0] sm:$0xff]
      %v673 = vld [vmem:[%s5 + $0x2f8] sm:$0xff]
      %v674 = vld [vmem:[%s5 + $0x300] sm:$0xff]
      %v675 = vld [vmem:[%s5 + $0x308] sm:$0xff]
      %v676 = vld [vmem:[%s5 + $0x310] sm:$0xff]
      %v677 = vld [vmem:[%s5 + $0x318] sm:$0xff]
      %v678 = vld [vmem:[%s5 + $0x320] sm:$0xff]
      %v679 = vld [vmem:[%s5 + $0x328] sm:$0xff]
      %v680 = vld [vmem:[%s5 + $0x330] sm:$0xff]
      %v681 = vld [vmem:[%s5 + $0x338] sm:$0xff]
      %v682 = vld [vmem:[%s5 + $0x340] sm:$0xff]
      %v683 = vld [vmem:[%s5 + $0x348] sm:$0xff]
      %v684 = vld [vmem:[%s5 + $0x350] sm:$0xff]
      %v685 = vld [vmem:[%s5 + $0x358] sm:$0xff]
      %v686 = vld [vmem:[%s5 + $0x360] sm:$0xff]
      %v687 = vld [vmem:[%s5 + $0x368] sm:$0xff]
      %v688 = vld [vmem:[%s5 + $0x370] sm:$0xff]
      %v689 = vld [vmem:[%s5 + $0x378] sm:$0xff]
      %v690 = vld [vmem:[%s5 + $0x380] sm:$0xff]
      %v691 = vld [vmem:[%s5 + $0x388] sm:$0xff]
      %v692 = vld [vmem:[%s5 + $0x390] sm:$0xff]
      %v693 = vld [vmem:[%s5 + $0x398] sm:$0xff]
      %v694 = vld [vmem:[%s5 + $0x3a0] sm:$0xff]
      %v695 = vld [vmem:[%s5 + $0x3a8] sm:$0xff]
      %v696 = vld [vmem:[%s5 + $0x3b0] sm:$0xff]
      %v697 = vld [vmem:[%s5 + $0x3b8] sm:$0xff]
      %v698 = vld [vmem:[%s5 + $0x3c0] sm:$0xff]
      %v699 = vld [vmem:[%s5 + $0x3c8] sm:$0xff]
      %v700 = vld [vmem:[%s5 + $0x3d0] sm:$0xff]
      %v701 = vld [vmem:[%s5 + $0x3d8] sm:$0xff]
      %v702 = vld [vmem:[%s5 + $0x3e0] sm:$0xff]
      %v703 = vld [vmem:[%s5 + $0x3e8] sm:$0xff]
      %v704 = vld [vmem:[%s5 + $0x3f0] sm:$0xff]
      %v705 = vld [vmem:[%s5 + $0x3f8] sm:$0xff]
      %v708 = vcombine.high %v576, %v576
      %v710 = vunpack.c.l.s4 1983009808
      %v711 = vunpack.c.0.s8 %v710
      %v712 = vlaneseq
      %v713 = vshrl.u32 %v712, 7
      %v714 = vsub.s32 %v711, %v713
      %v715 = vrot.slane %v576, %v714
      %v717 = vunpack.c.l.s4 1983009808
      %v718 = vunpack.c.0.s8 %v717
      %v719 = vlaneseq
      %v720 = vshrl.u32 %v719, 7
      %v721 = vsub.s32 %v718, %v720
      %v722 = vrot.slane %v708, %v721
      %v723 = vcombine.high %v715, %v715
      %v724 = vcombine.high %v722, %v722
      %v725 = vcombine.high %v577, %v577
      %v727 = vunpack.c.l.s4 1983009808
      %v728 = vunpack.c.0.s8 %v727
      %v729 = vlaneseq
      %v730 = vshrl.u32 %v729, 7
      %v731 = vsub.s32 %v728, %v730
      %v732 = vrot.slane %v577, %v731
      %v734 = vunpack.c.l.s4 1983009808
      %v735 = vunpack.c.0.s8 %v734
      %v736 = vlaneseq
      %v737 = vshrl.u32 %v736, 7
      %v738 = vsub.s32 %v735, %v737
      %v739 = vrot.slane %v725, %v738
      %v740 = vcombine.high %v732, %v732
      %v741 = vcombine.high %v739, %v739
      %v878 = vunpack.c.l.b16 %v578
      %v879 = vunpack.c.h.b16 %v578
      %v880 = vunpack.c.l.b16 %v579
      %v881 = vunpack.c.h.b16 %v579
      %v882 = vunpack.c.l.b16 %v580
      %v883 = vunpack.c.h.b16 %v580
      %v884 = vunpack.c.l.b16 %v581
      %v885 = vunpack.c.h.b16 %v581
      %v886 = vunpack.c.l.b16 %v582
      %v887 = vunpack.c.h.b16 %v582
      %v888 = vunpack.c.l.b16 %v583
      %v889 = vunpack.c.h.b16 %v583
      %v890 = vunpack.c.l.b16 %v584
      %v891 = vunpack.c.h.b16 %v584
      %v892 = vunpack.c.l.b16 %v585
      %v893 = vunpack.c.h.b16 %v585
      %v894 = vunpack.c.l.b16 %v586
      %v895 = vunpack.c.h.b16 %v586
      %v896 = vunpack.c.l.b16 %v587
      %v897 = vunpack.c.h.b16 %v587
      %v898 = vunpack.c.l.b16 %v588
      %v899 = vunpack.c.h.b16 %v588
      %v900 = vunpack.c.l.b16 %v589
      %v901 = vunpack.c.h.b16 %v589
      %v902 = vunpack.c.l.b16 %v590
      %v903 = vunpack.c.h.b16 %v590
      %v904 = vunpack.c.l.b16 %v591
      %v905 = vunpack.c.h.b16 %v591
      %v906 = vunpack.c.l.b16 %v592
      %v907 = vunpack.c.h.b16 %v592
      %v908 = vunpack.c.l.b16 %v593
      %v909 = vunpack.c.h.b16 %v593
      %v910 = vunpack.c.l.b16 %v594
      %v911 = vunpack.c.h.b16 %v594
      %v912 = vunpack.c.l.b16 %v595
      %v913 = vunpack.c.h.b16 %v595
      %v914 = vunpack.c.l.b16 %v596
      %v915 = vunpack.c.h.b16 %v596
      %v916 = vunpack.c.l.b16 %v597
      %v917 = vunpack.c.h.b16 %v597
      %v918 = vunpack.c.l.b16 %v598
      %v919 = vunpack.c.h.b16 %v598
      %v920 = vunpack.c.l.b16 %v599
      %v921 = vunpack.c.h.b16 %v599
      %v922 = vunpack.c.l.b16 %v600
      %v923 = vunpack.c.h.b16 %v600
      %v924 = vunpack.c.l.b16 %v601
      %v925 = vunpack.c.h.b16 %v601
      %v926 = vunpack.c.l.b16 %v602
      %v927 = vunpack.c.h.b16 %v602
      %v928 = vunpack.c.l.b16 %v603
      %v929 = vunpack.c.h.b16 %v603
      %v930 = vunpack.c.l.b16 %v604
      %v931 = vunpack.c.h.b16 %v604
      %v932 = vunpack.c.l.b16 %v605
      %v933 = vunpack.c.h.b16 %v605
      %v934 = vunpack.c.l.b16 %v606
      %v935 = vunpack.c.h.b16 %v606
      %v936 = vunpack.c.l.b16 %v607
      %v937 = vunpack.c.h.b16 %v607
      %v938 = vunpack.c.l.b16 %v608
      %v939 = vunpack.c.h.b16 %v608
      %v940 = vunpack.c.l.b16 %v609
      %v941 = vunpack.c.h.b16 %v609
      %v942 = vunpack.c.l.b16 %v610
      %v943 = vunpack.c.h.b16 %v610
      %v944 = vunpack.c.l.b16 %v611
      %v945 = vunpack.c.h.b16 %v611
      %v946 = vunpack.c.l.b16 %v612
      %v947 = vunpack.c.h.b16 %v612
      %v948 = vunpack.c.l.b16 %v613
      %v949 = vunpack.c.h.b16 %v613
      %v950 = vunpack.c.l.b16 %v614
      %v951 = vunpack.c.h.b16 %v614
      %v952 = vunpack.c.l.b16 %v615
      %v953 = vunpack.c.h.b16 %v615
      %v954 = vunpack.c.l.b16 %v616
      %v955 = vunpack.c.h.b16 %v616
      %v956 = vunpack.c.l.b16 %v617
      %v957 = vunpack.c.h.b16 %v617
      %v958 = vunpack.c.l.b16 %v618
      %v959 = vunpack.c.h.b16 %v618
      %v960 = vunpack.c.l.b16 %v619
      %v961 = vunpack.c.h.b16 %v619
      %v962 = vunpack.c.l.b16 %v620
      %v963 = vunpack.c.h.b16 %v620
      %v964 = vunpack.c.l.b16 %v621
      %v965 = vunpack.c.h.b16 %v621
      %v966 = vunpack.c.l.b16 %v622
      %v967 = vunpack.c.h.b16 %v622
      %v968 = vunpack.c.l.b16 %v623
      %v969 = vunpack.c.h.b16 %v623
      %v970 = vunpack.c.l.b16 %v624
      %v971 = vunpack.c.h.b16 %v624
      %v972 = vunpack.c.l.b16 %v625
      %v973 = vunpack.c.h.b16 %v625
      %v974 = vunpack.c.l.b16 %v626
      %v975 = vunpack.c.h.b16 %v626
      %v976 = vunpack.c.l.b16 %v627
      %v977 = vunpack.c.h.b16 %v627
      %v978 = vunpack.c.l.b16 %v628
      %v979 = vunpack.c.h.b16 %v628
      %v980 = vunpack.c.l.b16 %v629
      %v981 = vunpack.c.h.b16 %v629
      %v982 = vunpack.c.l.b16 %v630
      %v983 = vunpack.c.h.b16 %v630
      %v984 = vunpack.c.l.b16 %v631
      %v985 = vunpack.c.h.b16 %v631
      %v986 = vunpack.c.l.b16 %v632
      %v987 = vunpack.c.h.b16 %v632
      %v988 = vunpack.c.l.b16 %v633
      %v989 = vunpack.c.h.b16 %v633
      %v990 = vunpack.c.l.b16 %v634
      %v991 = vunpack.c.h.b16 %v634
      %v992 = vunpack.c.l.b16 %v635
      %v993 = vunpack.c.h.b16 %v635
      %v994 = vunpack.c.l.b16 %v636
      %v995 = vunpack.c.h.b16 %v636
      %v996 = vunpack.c.l.b16 %v637
      %v997 = vunpack.c.h.b16 %v637
      %v998 = vunpack.c.l.b16 %v638
      %v999 = vunpack.c.h.b16 %v638
      %v1000 = vunpack.c.l.b16 %v639
      %v1001 = vunpack.c.h.b16 %v639
      %v1002 = vunpack.c.l.b16 %v640
      %v1003 = vunpack.c.h.b16 %v640
      %v1004 = vunpack.c.l.b16 %v641
      %v1005 = vunpack.c.h.b16 %v641
      %v1006 = vunpack.c.l.b16 %v642
      %v1007 = vunpack.c.h.b16 %v642
      %v1008 = vunpack.c.l.b16 %v643
      %v1009 = vunpack.c.h.b16 %v643
      %v1010 = vunpack.c.l.b16 %v644
      %v1011 = vunpack.c.h.b16 %v644
      %v1012 = vunpack.c.l.b16 %v645
      %v1013 = vunpack.c.h.b16 %v645
      %v1014 = vunpack.c.l.b16 %v646
      %v1015 = vunpack.c.h.b16 %v646
      %v1016 = vunpack.c.l.b16 %v647
      %v1017 = vunpack.c.h.b16 %v647
      %v1018 = vunpack.c.l.b16 %v648
      %v1019 = vunpack.c.h.b16 %v648
      %v1020 = vunpack.c.l.b16 %v649
      %v1021 = vunpack.c.h.b16 %v649
      %v1022 = vunpack.c.l.b16 %v650
      %v1023 = vunpack.c.h.b16 %v650
      %v1024 = vunpack.c.l.b16 %v651
      %v1025 = vunpack.c.h.b16 %v651
      %v1026 = vunpack.c.l.b16 %v652
      %v1027 = vunpack.c.h.b16 %v652
      %v1028 = vunpack.c.l.b16 %v653
      %v1029 = vunpack.c.h.b16 %v653
      %v1030 = vunpack.c.l.b16 %v654
      %v1031 = vunpack.c.h.b16 %v654
      %v1032 = vunpack.c.l.b16 %v655
      %v1033 = vunpack.c.h.b16 %v655
      %v1034 = vunpack.c.l.b16 %v656
      %v1035 = vunpack.c.h.b16 %v656
      %v1036 = vunpack.c.l.b16 %v657
      %v1037 = vunpack.c.h.b16 %v657
      %v1038 = vunpack.c.l.b16 %v658
      %v1039 = vunpack.c.h.b16 %v658
      %v1040 = vunpack.c.l.b16 %v659
      %v1041 = vunpack.c.h.b16 %v659
      %v1042 = vunpack.c.l.b16 %v660
      %v1043 = vunpack.c.h.b16 %v660
      %v1044 = vunpack.c.l.b16 %v661
      %v1045 = vunpack.c.h.b16 %v661
      %v1046 = vunpack.c.l.b16 %v662
      %v1047 = vunpack.c.h.b16 %v662
      %v1048 = vunpack.c.l.b16 %v663
      %v1049 = vunpack.c.h.b16 %v663
      %v1050 = vunpack.c.l.b16 %v664
      %v1051 = vunpack.c.h.b16 %v664
      %v1052 = vunpack.c.l.b16 %v665
      %v1053 = vunpack.c.h.b16 %v665
      %v1054 = vunpack.c.l.b16 %v666
      %v1055 = vunpack.c.h.b16 %v666
      %v1056 = vunpack.c.l.b16 %v667
      %v1057 = vunpack.c.h.b16 %v667
      %v1058 = vunpack.c.l.b16 %v668
      %v1059 = vunpack.c.h.b16 %v668
      %v1060 = vunpack.c.l.b16 %v669
      %v1061 = vunpack.c.h.b16 %v669
      %v1062 = vunpack.c.l.b16 %v670
      %v1063 = vunpack.c.h.b16 %v670
      %v1064 = vunpack.c.l.b16 %v671
      %v1065 = vunpack.c.h.b16 %v671
      %v1066 = vunpack.c.l.b16 %v672
      %v1067 = vunpack.c.h.b16 %v672
      %v1068 = vunpack.c.l.b16 %v673
      %v1069 = vunpack.c.h.b16 %v673
      %v1070 = vunpack.c.l.b16 %v674
      %v1071 = vunpack.c.h.b16 %v674
      %v1072 = vunpack.c.l.b16 %v675
      %v1073 = vunpack.c.h.b16 %v675
      %v1074 = vunpack.c.l.b16 %v676
      %v1075 = vunpack.c.h.b16 %v676
      %v1076 = vunpack.c.l.b16 %v677
      %v1077 = vunpack.c.h.b16 %v677
      %v1078 = vunpack.c.l.b16 %v678
      %v1079 = vunpack.c.h.b16 %v678
      %v1080 = vunpack.c.l.b16 %v679
      %v1081 = vunpack.c.h.b16 %v679
      %v1082 = vunpack.c.l.b16 %v680
      %v1083 = vunpack.c.h.b16 %v680
      %v1084 = vunpack.c.l.b16 %v681
      %v1085 = vunpack.c.h.b16 %v681
      %v1086 = vunpack.c.l.b16 %v682
      %v1087 = vunpack.c.h.b16 %v682
      %v1088 = vunpack.c.l.b16 %v683
      %v1089 = vunpack.c.h.b16 %v683
      %v1090 = vunpack.c.l.b16 %v684
      %v1091 = vunpack.c.h.b16 %v684
      %v1092 = vunpack.c.l.b16 %v685
      %v1093 = vunpack.c.h.b16 %v685
      %v1094 = vunpack.c.l.b16 %v686
      %v1095 = vunpack.c.h.b16 %v686
      %v1096 = vunpack.c.l.b16 %v687
      %v1097 = vunpack.c.h.b16 %v687
      %v1098 = vunpack.c.l.b16 %v688
      %v1099 = vunpack.c.h.b16 %v688
      %v1100 = vunpack.c.l.b16 %v689
      %v1101 = vunpack.c.h.b16 %v689
      %v1102 = vunpack.c.l.b16 %v690
      %v1103 = vunpack.c.h.b16 %v690
      %v1104 = vunpack.c.l.b16 %v691
      %v1105 = vunpack.c.h.b16 %v691
      %v1106 = vunpack.c.l.b16 %v692
      %v1107 = vunpack.c.h.b16 %v692
      %v1108 = vunpack.c.l.b16 %v693
      %v1109 = vunpack.c.h.b16 %v693
      %v1110 = vunpack.c.l.b16 %v694
      %v1111 = vunpack.c.h.b16 %v694
      %v1112 = vunpack.c.l.b16 %v695
      %v1113 = vunpack.c.h.b16 %v695
      %v1114 = vunpack.c.l.b16 %v696
      %v1115 = vunpack.c.h.b16 %v696
      %v1116 = vunpack.c.l.b16 %v697
      %v1117 = vunpack.c.h.b16 %v697
      %v1118 = vunpack.c.l.b16 %v698
      %v1119 = vunpack.c.h.b16 %v698
      %v1120 = vunpack.c.l.b16 %v699
      %v1121 = vunpack.c.h.b16 %v699
      %v1122 = vunpack.c.l.b16 %v700
      %v1123 = vunpack.c.h.b16 %v700
      %v1124 = vunpack.c.l.b16 %v701
      %v1125 = vunpack.c.h.b16 %v701
      %v1126 = vunpack.c.l.b16 %v702
      %v1127 = vunpack.c.h.b16 %v702
      %v1128 = vunpack.c.l.b16 %v703
      %v1129 = vunpack.c.h.b16 %v703
      %v1130 = vunpack.c.l.b16 %v704
      %v1131 = vunpack.c.h.b16 %v704
      %v1132 = vunpack.c.l.b16 %v705
      %v1133 = vunpack.c.h.b16 %v705
      %v1134 = vpack.c.b16 %v880, %v878
      %v1135 = vpack.c.b16 %v881, %v879
      %v1136 = vpack.c.b16 %v884, %v882
      %v1137 = vpack.c.b16 %v885, %v883
      %v1138 = vpack.c.b16 %v888, %v886
      %v1139 = vpack.c.b16 %v889, %v887
      %v1140 = vpack.c.b16 %v892, %v890
      %v1141 = vpack.c.b16 %v893, %v891
      %v1142 = vpack.c.b16 %v896, %v894
      %v1143 = vpack.c.b16 %v897, %v895
      %v1144 = vpack.c.b16 %v900, %v898
      %v1145 = vpack.c.b16 %v901, %v899
      %v1146 = vpack.c.b16 %v904, %v902
      %v1147 = vpack.c.b16 %v905, %v903
      %v1148 = vpack.c.b16 %v908, %v906
      %v1149 = vpack.c.b16 %v909, %v907
      %v1150 = vpack.c.b16 %v912, %v910
      %v1151 = vpack.c.b16 %v913, %v911
      %v1152 = vpack.c.b16 %v916, %v914
      %v1153 = vpack.c.b16 %v917, %v915
      %v1154 = vpack.c.b16 %v920, %v918
      %v1155 = vpack.c.b16 %v921, %v919
      %v1156 = vpack.c.b16 %v924, %v922
      %v1157 = vpack.c.b16 %v925, %v923
      %v1158 = vpack.c.b16 %v928, %v926
      %v1159 = vpack.c.b16 %v929, %v927
      %v1160 = vpack.c.b16 %v932, %v930
      %v1161 = vpack.c.b16 %v933, %v931
      %v1162 = vpack.c.b16 %v936, %v934
      %v1163 = vpack.c.b16 %v937, %v935
      %v1164 = vpack.c.b16 %v940, %v938
      %v1165 = vpack.c.b16 %v941, %v939
      %v1166 = vpack.c.b16 %v944, %v942
      %v1167 = vpack.c.b16 %v945, %v943
      %v1168 = vpack.c.b16 %v948, %v946
      %v1169 = vpack.c.b16 %v949, %v947
      %v1170 = vpack.c.b16 %v952, %v950
      %v1171 = vpack.c.b16 %v953, %v951
      %v1172 = vpack.c.b16 %v956, %v954
      %v1173 = vpack.c.b16 %v957, %v955
      %v1174 = vpack.c.b16 %v960, %v958
      %v1175 = vpack.c.b16 %v961, %v959
      %v1176 = vpack.c.b16 %v964, %v962
      %v1177 = vpack.c.b16 %v965, %v963
      %v1178 = vpack.c.b16 %v968, %v966
      %v1179 = vpack.c.b16 %v969, %v967
      %v1180 = vpack.c.b16 %v972, %v970
      %v1181 = vpack.c.b16 %v973, %v971
      %v1182 = vpack.c.b16 %v976, %v974
      %v1183 = vpack.c.b16 %v977, %v975
      %v1184 = vpack.c.b16 %v980, %v978
      %v1185 = vpack.c.b16 %v981, %v979
      %v1186 = vpack.c.b16 %v984, %v982
      %v1187 = vpack.c.b16 %v985, %v983
      %v1188 = vpack.c.b16 %v988, %v986
      %v1189 = vpack.c.b16 %v989, %v987
      %v1190 = vpack.c.b16 %v992, %v990
      %v1191 = vpack.c.b16 %v993, %v991
      %v1192 = vpack.c.b16 %v996, %v994
      %v1193 = vpack.c.b16 %v997, %v995
      %v1194 = vpack.c.b16 %v1000, %v998
      %v1195 = vpack.c.b16 %v1001, %v999
      %v1196 = vpack.c.b16 %v1004, %v1002
      %v1197 = vpack.c.b16 %v1005, %v1003
      %v1198 = vpack.c.b16 %v1008, %v1006
      %v1199 = vpack.c.b16 %v1009, %v1007
      %v1200 = vpack.c.b16 %v1012, %v1010
      %v1201 = vpack.c.b16 %v1013, %v1011
      %v1202 = vpack.c.b16 %v1016, %v1014
      %v1203 = vpack.c.b16 %v1017, %v1015
      %v1204 = vpack.c.b16 %v1020, %v1018
      %v1205 = vpack.c.b16 %v1021, %v1019
      %v1206 = vpack.c.b16 %v1024, %v1022
      %v1207 = vpack.c.b16 %v1025, %v1023
      %v1208 = vpack.c.b16 %v1028, %v1026
      %v1209 = vpack.c.b16 %v1029, %v1027
      %v1210 = vpack.c.b16 %v1032, %v1030
      %v1211 = vpack.c.b16 %v1033, %v1031
      %v1212 = vpack.c.b16 %v1036, %v1034
      %v1213 = vpack.c.b16 %v1037, %v1035
      %v1214 = vpack.c.b16 %v1040, %v1038
      %v1215 = vpack.c.b16 %v1041, %v1039
      %v1216 = vpack.c.b16 %v1044, %v1042
      %v1217 = vpack.c.b16 %v1045, %v1043
      %v1218 = vpack.c.b16 %v1048, %v1046
      %v1219 = vpack.c.b16 %v1049, %v1047
      %v1220 = vpack.c.b16 %v1052, %v1050
      %v1221 = vpack.c.b16 %v1053, %v1051
      %v1222 = vpack.c.b16 %v1056, %v1054
      %v1223 = vpack.c.b16 %v1057, %v1055
      %v1224 = vpack.c.b16 %v1060, %v1058
      %v1225 = vpack.c.b16 %v1061, %v1059
      %v1226 = vpack.c.b16 %v1064, %v1062
      %v1227 = vpack.c.b16 %v1065, %v1063
      %v1228 = vpack.c.b16 %v1068, %v1066
      %v1229 = vpack.c.b16 %v1069, %v1067
      %v1230 = vpack.c.b16 %v1072, %v1070
      %v1231 = vpack.c.b16 %v1073, %v1071
      %v1232 = vpack.c.b16 %v1076, %v1074
      %v1233 = vpack.c.b16 %v1077, %v1075
      %v1234 = vpack.c.b16 %v1080, %v1078
      %v1235 = vpack.c.b16 %v1081, %v1079
      %v1236 = vpack.c.b16 %v1084, %v1082
      %v1237 = vpack.c.b16 %v1085, %v1083
      %v1238 = vpack.c.b16 %v1088, %v1086
      %v1239 = vpack.c.b16 %v1089, %v1087
      %v1240 = vpack.c.b16 %v1092, %v1090
      %v1241 = vpack.c.b16 %v1093, %v1091
      %v1242 = vpack.c.b16 %v1096, %v1094
      %v1243 = vpack.c.b16 %v1097, %v1095
      %v1244 = vpack.c.b16 %v1100, %v1098
      %v1245 = vpack.c.b16 %v1101, %v1099
      %v1246 = vpack.c.b16 %v1104, %v1102
      %v1247 = vpack.c.b16 %v1105, %v1103
      %v1248 = vpack.c.b16 %v1108, %v1106
      %v1249 = vpack.c.b16 %v1109, %v1107
      %v1250 = vpack.c.b16 %v1112, %v1110
      %v1251 = vpack.c.b16 %v1113, %v1111
      %v1252 = vpack.c.b16 %v1116, %v1114
      %v1253 = vpack.c.b16 %v1117, %v1115
      %v1254 = vpack.c.b16 %v1120, %v1118
      %v1255 = vpack.c.b16 %v1121, %v1119
      %v1256 = vpack.c.b16 %v1124, %v1122
      %v1257 = vpack.c.b16 %v1125, %v1123
      %v1258 = vpack.c.b16 %v1128, %v1126
      %v1259 = vpack.c.b16 %v1129, %v1127
      %v1260 = vpack.c.b16 %v1132, %v1130
      %v1261 = vpack.c.b16 %v1133, %v1131
      %1390 = vmatprep.subr.bf16.mxu0 %v1149
      %1391 = vmatpush1.bf16.msra.mxu0 %v1148
      %1392 = vmatprep.subr.bf16.mxu0 %v1147
      %1393 = vmatpush1.bf16.msra.mxu0 %v1146
      %1394 = vmatprep.subr.bf16.mxu0 %v1145
      %1395 = vmatpush1.bf16.msra.mxu0 %v1144
      %1396 = vmatprep.subr.bf16.mxu0 %v1143
      %1397 = vmatpush1.bf16.msra.mxu0 %v1142
      %1398 = vmatprep.subr.bf16.mxu0 %v1141
      %1399 = vmatpush1.bf16.msra.mxu0 %v1140
      %1400 = vmatprep.subr.bf16.mxu0 %v1139
      %1401 = vmatpush1.bf16.msra.mxu0 %v1138
      %1402 = vmatprep.subr.bf16.mxu0 %v1137
      %1403 = vmatpush1.bf16.msra.mxu0 %v1136
      %1404 = vmatprep.subr.bf16.mxu0 %v1135
      %1405 = vmatpush1.bf16.msra.mxu0 %v1134
      %1406 = vmatprep.subr.bf16.mxu0 %v1165
      %1407 = vmatpush2.bf16.msra.mxu0 %v1164
      %1408 = vmatprep.subr.bf16.mxu0 %v1163
      %1409 = vmatpush2.bf16.msra.mxu0 %v1162
      %1410 = vmatprep.subr.bf16.mxu0 %v1161
      %1411 = vmatpush2.bf16.msra.mxu0 %v1160
      %1412 = vmatprep.subr.bf16.mxu0 %v1159
      %1413 = vmatpush2.bf16.msra.mxu0 %v1158
      %1414 = vmatprep.subr.bf16.mxu0 %v1157
      %1415 = vmatpush2.bf16.msra.mxu0 %v1156
      %1416 = vmatprep.subr.bf16.mxu0 %v1155
      %1417 = vmatpush2.bf16.msra.mxu0 %v1154
      %1418 = vmatprep.subr.bf16.mxu0 %v1153
      %1419 = vmatpush2.bf16.msra.mxu0 %v1152
      %1420 = vmatprep.subr.bf16.mxu0 %v1151
      %1421 = vmatpush2.bf16.msra.mxu0 %v1150
      %1422 = vmatprep.mubr.bf16.mxu0 %v723
      %1423 = vmatmul.mubr.bf16.gmra.mxu0 %v715
      %v1424 = vpop.f32.mrf.mxu0
      %v1425 = vadd.f32 0.0, %v1424
      %v1426 = vpop.f32.mrf.mxu0
      %v1427 = vadd.f32 0.0, %v1426
      %v1428 = vpop.f32.mrf.mxu0
      %v1429 = vpop.f32.mrf.mxu0
      %1430 = vdwg.mxu0
      %1431 = vmatprep.subr.bf16.mxu0 %v1181
      %1432 = vmatpush1.bf16.msra.mxu0 %v1180
      %1433 = vmatprep.subr.bf16.mxu0 %v1179
      %1434 = vmatpush1.bf16.msra.mxu0 %v1178
      %1435 = vmatprep.subr.bf16.mxu0 %v1177
      %1436 = vmatpush1.bf16.msra.mxu0 %v1176
      %1437 = vmatprep.subr.bf16.mxu0 %v1175
      %1438 = vmatpush1.bf16.msra.mxu0 %v1174
      %1439 = vmatprep.subr.bf16.mxu0 %v1173
      %1440 = vmatpush1.bf16.msra.mxu0 %v1172
      %1441 = vmatprep.subr.bf16.mxu0 %v1171
      %1442 = vmatpush1.bf16.msra.mxu0 %v1170
      %1443 = vmatprep.subr.bf16.mxu0 %v1169
      %1444 = vmatpush1.bf16.msra.mxu0 %v1168
      %1445 = vmatprep.subr.bf16.mxu0 %v1167
      %1446 = vmatpush1.bf16.msra.mxu0 %v1166
      %1447 = vmatprep.subr.bf16.mxu0 %v1197
      %1448 = vmatpush2.bf16.msra.mxu0 %v1196
      %1449 = vmatprep.subr.bf16.mxu0 %v1195
      %1450 = vmatpush2.bf16.msra.mxu0 %v1194
      %1451 = vmatprep.subr.bf16.mxu0 %v1193
      %1452 = vmatpush2.bf16.msra.mxu0 %v1192
      %1453 = vmatprep.subr.bf16.mxu0 %v1191
      %1454 = vmatpush2.bf16.msra.mxu0 %v1190
      %1455 = vmatprep.subr.bf16.mxu0 %v1189
      %1456 = vmatpush2.bf16.msra.mxu0 %v1188
      %1457 = vmatprep.subr.bf16.mxu0 %v1187
      %1458 = vmatpush2.bf16.msra.mxu0 %v1186
      %1459 = vmatprep.subr.bf16.mxu0 %v1185
      %1460 = vmatpush2.bf16.msra.mxu0 %v1184
      %1461 = vmatprep.subr.bf16.mxu0 %v1183
      %1462 = vmatpush2.bf16.msra.mxu0 %v1182
      %1463 = vmatprep.mubr.bf16.mxu0 %v724
      %1464 = vmatmul.mubr.bf16.gmra.mxu0 %v722
      %v1465 = vpop.f32.mrf.mxu0
      %v1466 = vadd.f32 %v1425, %v1465
      %v1467 = vpop.f32.mrf.mxu0
      %v1468 = vadd.f32 %v1427, %v1467
      %v1469 = vpop.f32.mrf.mxu0
      %v1470 = vpop.f32.mrf.mxu0
      %1471 = vdwg.mxu0
      %1472 = vmatprep.subr.bf16.mxu0 %v1213
      %1473 = vmatpush1.bf16.msra.mxu0 %v1212
      %1474 = vmatprep.subr.bf16.mxu0 %v1211
      %1475 = vmatpush1.bf16.msra.mxu0 %v1210
      %1476 = vmatprep.subr.bf16.mxu0 %v1209
      %1477 = vmatpush1.bf16.msra.mxu0 %v1208
      %1478 = vmatprep.subr.bf16.mxu0 %v1207
      %1479 = vmatpush1.bf16.msra.mxu0 %v1206
      %1480 = vmatprep.subr.bf16.mxu0 %v1205
      %1481 = vmatpush1.bf16.msra.mxu0 %v1204
      %1482 = vmatprep.subr.bf16.mxu0 %v1203
      %1483 = vmatpush1.bf16.msra.mxu0 %v1202
      %1484 = vmatprep.subr.bf16.mxu0 %v1201
      %1485 = vmatpush1.bf16.msra.mxu0 %v1200
      %1486 = vmatprep.subr.bf16.mxu0 %v1199
      %1487 = vmatpush1.bf16.msra.mxu0 %v1198
      %1488 = vmatprep.subr.bf16.mxu0 %v1229
      %1489 = vmatpush2.bf16.msra.mxu0 %v1228
      %1490 = vmatprep.subr.bf16.mxu0 %v1227
      %1491 = vmatpush2.bf16.msra.mxu0 %v1226
      %1492 = vmatprep.subr.bf16.mxu0 %v1225
      %1493 = vmatpush2.bf16.msra.mxu0 %v1224
      %1494 = vmatprep.subr.bf16.mxu0 %v1223
      %1495 = vmatpush2.bf16.msra.mxu0 %v1222
      %1496 = vmatprep.subr.bf16.mxu0 %v1221
      %1497 = vmatpush2.bf16.msra.mxu0 %v1220
      %1498 = vmatprep.subr.bf16.mxu0 %v1219
      %1499 = vmatpush2.bf16.msra.mxu0 %v1218
      %1500 = vmatprep.subr.bf16.mxu0 %v1217
      %1501 = vmatpush2.bf16.msra.mxu0 %v1216
      %1502 = vmatprep.subr.bf16.mxu0 %v1215
      %1503 = vmatpush2.bf16.msra.mxu0 %v1214
      %1504 = vmatprep.mubr.bf16.mxu0 %v740
      %1505 = vmatmul.mubr.bf16.gmra.mxu0 %v732
      %v1506 = vpop.f32.mrf.mxu0
      %v1507 = vadd.f32 %v1466, %v1506
      %v1508 = vpop.f32.mrf.mxu0
      %v1509 = vadd.f32 %v1468, %v1508
      %v1510 = vpop.f32.mrf.mxu0
      %v1511 = vpop.f32.mrf.mxu0
      %1512 = vdwg.mxu0
      %1513 = vmatprep.subr.bf16.mxu0 %v1245
      %1514 = vmatpush1.bf16.msra.mxu0 %v1244
      %1515 = vmatprep.subr.bf16.mxu0 %v1243
      %1516 = vmatpush1.bf16.msra.mxu0 %v1242
      %1517 = vmatprep.subr.bf16.mxu0 %v1241
      %1518 = vmatpush1.bf16.msra.mxu0 %v1240
      %1519 = vmatprep.subr.bf16.mxu0 %v1239
      %1520 = vmatpush1.bf16.msra.mxu0 %v1238
      %1521 = vmatprep.subr.bf16.mxu0 %v1237
      %1522 = vmatpush1.bf16.msra.mxu0 %v1236
      %1523 = vmatprep.subr.bf16.mxu0 %v1235
      %1524 = vmatpush1.bf16.msra.mxu0 %v1234
      %1525 = vmatprep.subr.bf16.mxu0 %v1233
      %1526 = vmatpush1.bf16.msra.mxu0 %v1232
      %1527 = vmatprep.subr.bf16.mxu0 %v1231
      %1528 = vmatpush1.bf16.msra.mxu0 %v1230
      %1529 = vmatprep.subr.bf16.mxu0 %v1261
      %1530 = vmatpush2.bf16.msra.mxu0 %v1260
      %1531 = vmatprep.subr.bf16.mxu0 %v1259
      %1532 = vmatpush2.bf16.msra.mxu0 %v1258
      %1533 = vmatprep.subr.bf16.mxu0 %v1257
      %1534 = vmatpush2.bf16.msra.mxu0 %v1256
      %1535 = vmatprep.subr.bf16.mxu0 %v1255
      %1536 = vmatpush2.bf16.msra.mxu0 %v1254
      %1537 = vmatprep.subr.bf16.mxu0 %v1253
      %1538 = vmatpush2.bf16.msra.mxu0 %v1252
      %1539 = vmatprep.subr.bf16.mxu0 %v1251
      %1540 = vmatpush2.bf16.msra.mxu0 %v1250
      %1541 = vmatprep.subr.bf16.mxu0 %v1249
      %1542 = vmatpush2.bf16.msra.mxu0 %v1248
      %1543 = vmatprep.subr.bf16.mxu0 %v1247
      %1544 = vmatpush2.bf16.msra.mxu0 %v1246
      %1545 = vmatprep.mubr.bf16.mxu0 %v741
      %1546 = vmatmul.mubr.bf16.gmra.mxu0 %v739
      %v1547 = vpop.f32.mrf.mxu0
      %v1548 = vadd.f32 %v1507, %v1547
      %v1549 = vpop.f32.mrf.mxu0
      %v1550 = vadd.f32 %v1509, %v1549
      %v1551 = vpop.f32.mrf.mxu0
      %v1552 = vpop.f32.mrf.mxu0
      %1553 = vdwg.mxu0
      %v1554 = vld [vmem:[%s6] sm:$0xf]
      %v1555 = vld [vmem:[%s7] sm:$0xf]
      %vm1556 = vcmask 31744
      %v1558 = vsel %vm1556, %v1555, 0
      %vm1560 = vcmask 1043456
      %v1562 = vsel %vm1560, %v1548, 0
      %v1565 = vsel %vm1560, %v1550, 0
      %1567 = vmatprep.subr.mxu0 0.0
      %1568 = vmatpush1.msra.mxu0 0.0
      %1569 = vmatprep.subr.mxu0 0.0
      %1570 = vmatpush1.msra.mxu0 0.0
      %1571 = vmatprep.subr.mxu0 0.0
      %1572 = vmatpush1.msra.mxu0 0.0
      %1573 = vmatprep.subr.mxu0 0.0
      %1574 = vmatpush1.msra.mxu0 0.0
      %1575 = vmatprep.subr.mxu0 0.0
      %1576 = vmatpush1.msra.mxu0 0.0
      %1577 = vmatprep.subr.mxu0 0.0
      %1578 = vmatpush1.msra.mxu0 0.0
      %1579 = vmatprep.subr.mxu0 0.0
      %1580 = vmatpush1.msra.mxu0 0.0
      %1581 = vmatprep.subr.mxu0 0.0
      %1582 = vmatpush1.msra.mxu0 0.0
      %1583 = vmatprep.subr.mxu0 0.0
      %1584 = vmatpush1.msra.mxu0 0.0
      %1585 = vmatprep.subr.mxu0 0.0
      %1586 = vmatpush1.msra.mxu0 0.0
      %1587 = vmatprep.subr.mxu0 0.0
      %1588 = vmatpush1.msra.mxu0 0.0
      %1589 = vmatprep.subr.mxu0 0.0
      %1590 = vmatpush1.msra.mxu0 0.0
      %1591 = vmatprep.subr.mxu0 0.0
      %1592 = vmatpush1.msra.mxu0 0.0
      %1593 = vmatprep.subr.mxu0 0.0
      %1594 = vmatpush1.msra.mxu0 0.0
      %1595 = vmatprep.subr.mxu0 0.0
      %1596 = vmatpush1.msra.mxu0 0.0
      %1597 = vmatprep.subr.mxu0 %v1565
      %1598 = vmatpush1.msra.mxu0 %v1562
      %1599 = vmatprep.subr.mxu0 0.0
      %1600 = vmatpush2.msra.mxu0 0.0
      %1601 = vmatprep.subr.mxu0 0.0
      %1602 = vmatpush2.msra.mxu0 0.0
      %1603 = vmatprep.subr.mxu0 0.0
      %1604 = vmatpush2.msra.mxu0 0.0
      %1605 = vmatprep.subr.mxu0 0.0
      %1606 = vmatpush2.msra.mxu0 0.0
      %1607 = vmatprep.subr.mxu0 0.0
      %1608 = vmatpush2.msra.mxu0 0.0
      %1609 = vmatprep.subr.mxu0 0.0
      %1610 = vmatpush2.msra.mxu0 0.0
      %1611 = vmatprep.subr.mxu0 0.0
      %1612 = vmatpush2.msra.mxu0 0.0
      %1613 = vmatprep.subr.mxu0 0.0
      %1614 = vmatpush2.msra.mxu0 0.0
      %1615 = vmatprep.subr.mxu0 0.0
      %1616 = vmatpush2.msra.mxu0 0.0
      %1617 = vmatprep.subr.mxu0 0.0
      %1618 = vmatpush2.msra.mxu0 0.0
      %1619 = vmatprep.subr.mxu0 0.0
      %1620 = vmatpush2.msra.mxu0 0.0
      %1621 = vmatprep.subr.mxu0 0.0
      %1622 = vmatpush2.msra.mxu0 0.0
      %1623 = vmatprep.subr.mxu0 0.0
      %1624 = vmatpush2.msra.mxu0 0.0
      %1625 = vmatprep.subr.mxu0 0.0
      %1626 = vmatpush2.msra.mxu0 0.0
      %1627 = vmatprep.subr.mxu0 0.0
      %1628 = vmatpush2.msra.mxu0 0.0
      %1629 = vmatprep.subr.mxu0 0.0
      %1630 = vmatpush2.msra.mxu0 0.0
      %1631 = vmatprep.mubr.f32.mxu0 0.0
      %1632 = vmatmul.mubr.f32.gmra.mxu0 %v1558
      %v1633 = vpop.f32.mrf.mxu0
      %v1634 = vadd.f32 0.0, %v1633
      %v1635 = vpop.f32.mrf.mxu0
      %v1636 = vadd.f32 0.0, %v1635
      %1637 = vdwg.mxu0
      %v1639 = vsel %vm1556, %v1554, 0
      %v1642 = vsel %vm1560, %v572, 0
      %v1645 = vsel %vm1560, %v574, 0
      %1647 = vmatprep.subr.mxu0 0.0
      %1648 = vmatpush1.msra.mxu0 0.0
      %1649 = vmatprep.subr.mxu0 0.0
      %1650 = vmatpush1.msra.mxu0 0.0
      %1651 = vmatprep.subr.mxu0 0.0
      %1652 = vmatpush1.msra.mxu0 0.0
      %1653 = vmatprep.subr.mxu0 0.0
      %1654 = vmatpush1.msra.mxu0 0.0
      %1655 = vmatprep.subr.mxu0 0.0
      %1656 = vmatpush1.msra.mxu0 0.0
      %1657 = vmatprep.subr.mxu0 0.0
      %1658 = vmatpush1.msra.mxu0 0.0
      %1659 = vmatprep.subr.mxu0 0.0
      %1660 = vmatpush1.msra.mxu0 0.0
      %1661 = vmatprep.subr.mxu0 0.0
      %1662 = vmatpush1.msra.mxu0 0.0
      %1663 = vmatprep.subr.mxu0 0.0
      %1664 = vmatpush1.msra.mxu0 0.0
      %1665 = vmatprep.subr.mxu0 0.0
      %1666 = vmatpush1.msra.mxu0 0.0
      %1667 = vmatprep.subr.mxu0 0.0
      %1668 = vmatpush1.msra.mxu0 0.0
      %1669 = vmatprep.subr.mxu0 0.0
      %1670 = vmatpush1.msra.mxu0 0.0
      %1671 = vmatprep.subr.mxu0 0.0
      %1672 = vmatpush1.msra.mxu0 0.0
      %1673 = vmatprep.subr.mxu0 0.0
      %1674 = vmatpush1.msra.mxu0 0.0
      %1675 = vmatprep.subr.mxu0 0.0
      %1676 = vmatpush1.msra.mxu0 0.0
      %1677 = vmatprep.subr.mxu0 %v1645
      %1678 = vmatpush1.msra.mxu0 %v1642
      %1679 = vmatprep.subr.mxu0 0.0
      %1680 = vmatpush2.msra.mxu0 0.0
      %1681 = vmatprep.subr.mxu0 0.0
      %1682 = vmatpush2.msra.mxu0 0.0
      %1683 = vmatprep.subr.mxu0 0.0
      %1684 = vmatpush2.msra.mxu0 0.0
      %1685 = vmatprep.subr.mxu0 0.0
      %1686 = vmatpush2.msra.mxu0 0.0
      %1687 = vmatprep.subr.mxu0 0.0
      %1688 = vmatpush2.msra.mxu0 0.0
      %1689 = vmatprep.subr.mxu0 0.0
      %1690 = vmatpush2.msra.mxu0 0.0
      %1691 = vmatprep.subr.mxu0 0.0
      %1692 = vmatpush2.msra.mxu0 0.0
      %1693 = vmatprep.subr.mxu0 0.0
      %1694 = vmatpush2.msra.mxu0 0.0
      %1695 = vmatprep.subr.mxu0 0.0
      %1696 = vmatpush2.msra.mxu0 0.0
      %1697 = vmatprep.subr.mxu0 0.0
      %1698 = vmatpush2.msra.mxu0 0.0
      %1699 = vmatprep.subr.mxu0 0.0
      %1700 = vmatpush2.msra.mxu0 0.0
      %1701 = vmatprep.subr.mxu0 0.0
      %1702 = vmatpush2.msra.mxu0 0.0
      %1703 = vmatprep.subr.mxu0 0.0
      %1704 = vmatpush2.msra.mxu0 0.0
      %1705 = vmatprep.subr.mxu0 0.0
      %1706 = vmatpush2.msra.mxu0 0.0
      %1707 = vmatprep.subr.mxu0 0.0
      %1708 = vmatpush2.msra.mxu0 0.0
      %1709 = vmatprep.subr.mxu0 0.0
      %1710 = vmatpush2.msra.mxu0 0.0
      %1711 = vmatprep.mubr.f32.mxu0 0.0
      %1712 = vmatmul.mubr.f32.gmra.mxu0 %v1639
      %v1713 = vpop.f32.mrf.mxu0
      %v1714 = vadd.f32 %v1634, %v1713
      %v1715 = vpop.f32.mrf.mxu0
      %v1716 = vadd.f32 %v1636, %v1715
      %1717 = vdwg.mxu0
      %v1718 = vld [vmem:[%s8] sm:$0xf]
      %1720 = vset.pattern.permute.xlu0 0
      %1721 = vperm.xlu0 %1720, %v1718
      %v1722 = vpop.permute.xlu0 %1721
      %v1724 = vadd.f32 %v1714, %v1722
      %v1725 = vadd.f32 %v1716, %v1722
      %v1728 = vcombine.low %v1724, %v1725
      %1730 = vst [vmem:[%s372] sm:$0xff] %v1728
      %p1731 = scmp.lt.s32.totalorder %s20, 1
      %s1732 = scalar_select %p1731, %s20, 1
      %s1733 = smul.addr %s1732, 2
      %s1734 = smul.addr %s1733, 4
      %s1735 = scalar_lea.vmem %s9, %s1734
      // Predicated region
      $region57: #{bpa_forward.1} parent=55 // pred_check
        %p1736 = pneg %p242
      $region58: #{bpa_forward.1} parent=55 // pred_check_branch
        %1738 = sbr.rel (%p1736) target = $region60
      $region59: #{bpa_forward.1} parent=55 // pred_region
        _
      $region60: #{bpa_forward.1} parent=55 // pred_fallthru
        _
    $region56: #{bpa_forward.1} parent=5 // pred_fallthru
      _
    %p1739 = scmp.le.s32.totalorder 2, %s15
    // Predicated region
    $region61: #{bpa_forward.1} parent=5 // pred_check
      %p1740 = pneg %p1739
    $region62: #{bpa_forward.1} parent=5 // pred_check_branch
      %1742 = sbr.rel (%p1740) target = $region64
    $region63: #{bpa_forward.1} parent=5 // pred_region
      %s1743 = ssub.s32 %s15, 2
      // Predicated region
      $region65: #{bpa_forward.1} parent=63 // pred_check
        %p1744 = pneg %p248
      $region66: #{bpa_forward.1} parent=63 // pred_check_branch
        %1746 = sbr.rel (%p1744) target = $region68
      $region67: #{bpa_forward.1} parent=63 // pred_region
        %p1747 = scmp.lt.s32.totalorder %s21, 1
        %s1748 = scalar_select %p1747, %s21, 1
        %s1749 = smul.addr %s1748, 2
        %s1750 = smul.addr %s1749, 4
        %s1751 = scalar_lea.vmem %s9, %s1750
      $region68: #{bpa_forward.1} parent=63 // pred_fallthru
        _
    $region64: #{bpa_forward.1} parent=5 // pred_fallthru
      _
  $region6: #{bpa_forward.1} parent=0 // loop_footer
    %s19 = sadd.s32 1, %s15
  $region7: #{bpa_forward.1} parent=0 // loop_footer_branch
    %14 = sbr.rel target = $region3
  $region8: #{bpa_forward.1} parent=0 // loop_exit
    _

</llo_original>
